<compile_context>
chip_gen: v5e
topology: v5e:2x2
jax: 0.10.0
libtpu: 0.0.40
codegen_flags: <defaults>
</compile_context>

<pallas_src>
import functools

import jax
import jax.numpy as jnp
from jax import lax
from jax.experimental import pallas as pl
from jax.experimental.pallas import tpu as pltpu

LSTM_HIDDEN = 64
HIDDEN_DIM = 32
BN_EPS = 1e-5
VMEM_LIMIT_BYTES = 32 * 1024 * 1024
VMEM_TILE_BUDGET = 24 * 1024 * 1024      # headroom below the limit


def _round_up(a, m):
    return (a + m - 1) // m * m


def _choose_batch_tile(B, T, K, H):
    """Largest MXU-row-friendly batch tile that keeps per-tile VMEM bounded."""
    # Per-row VMEM: gx scratch (T*4H f32) + double-buffered bf16 x (2*T*K)
    # + double-buffered f32 h_out (2*H).
    bytes_per_row = T * 4 * H * 4 + 2 * T * K * 2 + 2 * H * 4
    tb_vmem = max(8, (VMEM_TILE_BUDGET // bytes_per_row) // 8 * 8)
    tb = min(512, tb_vmem, _round_up(B, 8))
    return max(8, tb)


# ---------------------------------------------------------------------------
# Kernel 1: LSTM recurrence over one batch tile.
# ---------------------------------------------------------------------------
def lstm_recurrence_kernel(
    x_ref,      # (T, tb, K)   bf16, time-major input tile
    wih_ref,    # (K, 4H)      bf16, input->gates weights (gate order i,f,g,o)
    whh_ref,    # (H, 4H)      bf16, hidden->gates weights
    b_ref,      # (1, 4H)      f32, combined bias (b_ih + b_hh)
    h_out_ref,  # (tb, H)      f32, last-step hidden state (output)
    gx_scr,     # VMEM (T, tb, 4H) f32, hoisted input projection
    *,
    seq_len,
    lstm_hidden,
):
    T, H = seq_len, lstm_hidden
    tb = h_out_ref.shape[0]
    K = x_ref.shape[-1]

    # Hoist constant weight / bias reads out of the loops.
    wih = wih_ref[...]
    whh = whh_ref[...]
    bias = b_ref[...]

    # ---- hoisted input projection for ALL timesteps in one MXU matmul -------
    # (T, tb, K) -> (T*tb, K): leading-dim collapse only (lane dim unchanged).
    xt = x_ref[...]
    gx = jnp.dot(xt.reshape(T * tb, K), wih, preferred_element_type=jnp.float32)
    gx_scr[...] = gx.reshape(T, tb, 4 * H) + bias

    # ---- fully-unrolled recurrence: only h @ W_hh on the serial path ---------
    h = jnp.zeros((tb, H), jnp.float32)
    c = jnp.zeros((tb, H), jnp.float32)
    for t in range(T):
        gates = gx_scr[t] + jnp.dot(
            h.astype(jnp.bfloat16), whh, preferred_element_type=jnp.float32
        )                                          # (tb, 4H) f32
        i_g = jax.nn.sigmoid(gates[:, 0 * H:1 * H])
        f_g = jax.nn.sigmoid(gates[:, 1 * H:2 * H])
        g_g = jnp.tanh(gates[:, 2 * H:3 * H])
        o_g = jax.nn.sigmoid(gates[:, 3 * H:4 * H])
        c = f_g * c + i_g * g_g
        h = o_g * jnp.tanh(c)

    h_out_ref[...] = h


# ---------------------------------------------------------------------------
# Kernel 2: BatchNorm (global batch statistics) + FC head.
# ---------------------------------------------------------------------------
def bn_fc_head_kernel(
    h_ref,      # (Bp, H) f32, last hidden states (rows >= valid_rows are pad)
    gamma_ref,  # (1, H)
    beta_ref,   # (1, H)
    w1_ref,     # (H, hidden_dim)
    b1_ref,     # (1, hidden_dim)
    w2_ref,     # (hidden_dim, 1)
    b2_ref,     # (1, 1)
    out_ref,    # (Bp, 1)
    *,
    valid_rows,
):
    h = h_ref[...]
    bp, hdim = h.shape

    # Mask padded rows out of the (training-mode, biased) batch statistics so
    # BN stays global over the real batch even though the LSTM was batch-tiled.
    row = lax.broadcasted_iota(jnp.int32, (bp, hdim), 0)
    mask = (row < valid_rows).astype(jnp.float32)
    inv_n = 1.0 / float(valid_rows)

    mean = jnp.sum(h * mask, axis=0, keepdims=True) * inv_n
    diff = (h - mean) * mask
    var = jnp.sum(diff * diff, axis=0, keepdims=True) * inv_n

    xn = (h - mean) * lax.rsqrt(var + BN_EPS)
    xn = xn * gamma_ref[...] + beta_ref[...]

    hidden = jnp.dot(xn, w1_ref[...], preferred_element_type=jnp.float32) + b1_ref[...]
    hidden = jnp.maximum(hidden, 0.0)            # ReLU; Dropout(0.0) == Identity
    out = jnp.dot(hidden, w2_ref[...], preferred_element_type=jnp.float32) + b2_ref[...]
    # TODO(synk): output stays (Bp, 1); a lane-dense (1, Bp) store would need an
    # in-kernel transpose and the head is tiny, so it is left as-is.
    out_ref[...] = out.astype(out_ref.dtype)


# ---------------------------------------------------------------------------
# Parameter init mirroring PyTorch defaults (shapes / ranges only).
# ---------------------------------------------------------------------------
def init_params(key, k, hidden_dim=HIDDEN_DIM, lstm_hidden_dim=LSTM_HIDDEN):
    H = lstm_hidden_dim
    ks = jax.random.split(key, 8)
    s_lstm = 1.0 / jnp.sqrt(H)
    w_ih = jax.random.uniform(ks[0], (k, 4 * H), jnp.float32, -s_lstm, s_lstm)
    w_hh = jax.random.uniform(ks[1], (H, 4 * H), jnp.float32, -s_lstm, s_lstm)
    b_ih = jax.random.uniform(ks[2], (4 * H,), jnp.float32, -s_lstm, s_lstm)
    b_hh = jax.random.uniform(ks[3], (4 * H,), jnp.float32, -s_lstm, s_lstm)
    b = (b_ih + b_hh).reshape(1, 4 * H)

    gamma = jnp.ones((1, H), jnp.float32)
    beta = jnp.zeros((1, H), jnp.float32)

    s1 = 1.0 / jnp.sqrt(H)
    w1 = jax.random.uniform(ks[4], (H, hidden_dim), jnp.float32, -s1, s1)
    b1 = jax.random.uniform(ks[5], (1, hidden_dim), jnp.float32, -s1, s1)
    s2 = 1.0 / jnp.sqrt(hidden_dim)
    w2 = jax.random.uniform(ks[6], (hidden_dim, 1), jnp.float32, -s2, s2)
    b2 = jax.random.uniform(ks[7], (1, 1), jnp.float32, -s2, s2)
    return dict(w_ih=w_ih, w_hh=w_hh, b=b, gamma=gamma, beta=beta,
                w1=w1, b1=b1, w2=w2, b2=b2)


# ---------------------------------------------------------------------------
# Wrapper
# ---------------------------------------------------------------------------
@jax.jit
def two_layer_lstm_forward(x, params):
    batch, N, T, K = x.shape
    B = batch * N
    H = params["w_hh"].shape[0]

    # Batch tile: MXU-row-friendly tile, bounded so gx scratch + double-buffered
    # inputs stay inside the VMEM limit; padded-to-8 single tile for small B.
    tb = _choose_batch_tile(B, T, K, H)
    Bp = _round_up(B, tb)

    x_flat = x.reshape(B, T, K).astype(jnp.float32)
    if Bp != B:
        x_flat = jnp.pad(x_flat, ((0, Bp - B), (0, 0), (0, 0)))
    # time-major, bf16 MXU operand
    x_tm = x_flat.transpose(1, 0, 2).astype(jnp.bfloat16)    # (T, Bp, K)

    wih = params["w_ih"].astype(jnp.bfloat16)
    whh = params["w_hh"].astype(jnp.bfloat16)

    h_last = pl.pallas_call(
        functools.partial(lstm_recurrence_kernel, seq_len=T, lstm_hidden=H),
        out_shape=jax.ShapeDtypeStruct((Bp, H), jnp.float32),
        grid_spec=pltpu.PrefetchScalarGridSpec(
            num_scalar_prefetch=0,
            grid=(Bp // tb,),
            in_specs=[
                pl.BlockSpec((T, tb, K), lambda i: (0, i, 0)),
                pl.BlockSpec((K, 4 * H), lambda i: (0, 0)),
                pl.BlockSpec((H, 4 * H), lambda i: (0, 0)),
                pl.BlockSpec((1, 4 * H), lambda i: (0, 0)),
            ],
            out_specs=pl.BlockSpec((tb, H), lambda i: (i, 0)),
            scratch_shapes=[pltpu.VMEM((T, tb, 4 * H), jnp.float32)],
        ),
        compiler_params=pltpu.CompilerParams(
            dimension_semantics=("parallel",),        # megacore sharding on v7x
            vmem_limit_bytes=VMEM_LIMIT_BYTES,        # explicit, safe on v5e..v7x
        ),
    )(x_tm, wih, whh, params["b"])

    out = pl.pallas_call(
        functools.partial(bn_fc_head_kernel, valid_rows=B),
        out_shape=jax.ShapeDtypeStruct((Bp, 1), jnp.float32),
        in_specs=[pl.BlockSpec(memory_space=pltpu.MemorySpace.VMEM)] * 7,
        out_specs=pl.BlockSpec(memory_space=pltpu.MemorySpace.VMEM),
    )(h_last, params["gamma"], params["beta"],
      params["w1"], params["b1"], params["w2"], params["b2"])

    return out[:B, 0].reshape(batch, N)


# ---------------------------------------------------------------------------
# Pure-JAX f32 reference (for a sanity check).
# ---------------------------------------------------------------------------
def reference_forward(x, params):
    batch, N, T, K = x.shape
    B = batch * N
    H = params["w_hh"].shape[0]
    xf = x.reshape(B, T, K).astype(jnp.float32)
    h = jnp.zeros((B, H), jnp.float32)
    c = jnp.zeros((B, H), jnp.float32)
    for t in range(T):
        gates = xf[:, t, :] @ params["w_ih"] + h @ params["w_hh"] + params["b"]
        i_g = jax.nn.sigmoid(gates[:, 0 * H:1 * H])
        f_g = jax.nn.sigmoid(gates[:, 1 * H:2 * H])
        g_g = jnp.tanh(gates[:, 2 * H:3 * H])
        o_g = jax.nn.sigmoid(gates[:, 3 * H:4 * H])
        c = f_g * c + i_g * g_g
        h = o_g * jnp.tanh(c)
    mean = jnp.mean(h, axis=0, keepdims=True)
    var = jnp.mean((h - mean) ** 2, axis=0, keepdims=True)
    xn = (h - mean) / jnp.sqrt(var + BN_EPS) * params["gamma"] + params["beta"]
    hid = jnp.maximum(xn @ params["w1"] + params["b1"], 0.0)
    out = hid @ params["w2"] + params["b2"]
    return out.reshape(batch, N)


if __name__ == "__main__":
    key = jax.random.PRNGKey(0)
    k_x, k_p = jax.random.split(key)

    batch, N, lookback, k = 2, 8, 8, 8
    x = jax.random.normal(k_x, (batch, N, lookback, k), jnp.float32)
    params = init_params(k_p, k)

    out = two_layer_lstm_forward(x, params)
    out = jax.block_until_ready(out)

    assert out.shape == (batch, N), out.shape
    assert bool(jnp.all(jnp.isfinite(out)))

    # Sanity check vs f32 reference (kernel uses bf16 MXU operands -> loose tol).
    ref = reference_forward(x, params)
    assert bool(jnp.allclose(out, ref, atol=1e-1, rtol=1e-1)), float(
        jnp.max(jnp.abs(out - ref)))

    print("KERNEL_OK")
</pallas_src>

<mosaic_0001>
module attributes {stable_mosaic.version = 11 : i64} {
  func.func @lstm_recurrence_kernel(%arg0: i32, %arg1: memref<8x16x8xbf16, #tpu.memory_space<vmem>>, %arg2: memref<8x256xbf16, #tpu.memory_space<vmem>>, %arg3: memref<64x256xbf16, #tpu.memory_space<vmem>>, %arg4: memref<1x256xf32, #tpu.memory_space<vmem>>, %arg5: memref<16x64xf32, #tpu.memory_space<vmem>>, %arg6: memref<8x16x256xf32, #tpu.memory_space<vmem>>) attributes {dimension_semantics = [#tpu.dimension_semantics<parallel>], iteration_bounds = array<i64: 1>, scalar_prefetch = 0 : i64, scratch_operands = 1 : i64, tpu.core_type = #tpu.core_type<tc>, window_params = [{transform_indices = @transform_0, window_bounds = array<i64: 8, 16, 8>}, {pipeline_mode = #tpu.pipeline_mode<synchronous>, transform_indices = @transform_1, window_bounds = array<i64: 8, 256>}, {pipeline_mode = #tpu.pipeline_mode<synchronous>, transform_indices = @transform_2, window_bounds = array<i64: 64, 256>}, {pipeline_mode = #tpu.pipeline_mode<synchronous>, transform_indices = @transform_3, window_bounds = array<i64: 1, 256>}, {transform_indices = @transform_4, window_bounds = array<i64: 16, 64>}]} {
    %c0 = arith.constant 0 : index
    %c0_0 = arith.constant 0 : index
    %0 = vector.load %arg2[%c0, %c0_0] : memref<8x256xbf16, #tpu.memory_space<vmem>>, vector<8x256xbf16>
    %c0_1 = arith.constant 0 : index
    %c0_2 = arith.constant 0 : index
    %1 = vector.load %arg3[%c0_1, %c0_2] : memref<64x256xbf16, #tpu.memory_space<vmem>>, vector<64x256xbf16>
    %c0_3 = arith.constant 0 : index
    %c0_4 = arith.constant 0 : index
    %2 = vector.load %arg4[%c0_3, %c0_4] : memref<1x256xf32, #tpu.memory_space<vmem>>, vector<1x256xf32>
    %c0_5 = arith.constant 0 : index
    %c0_6 = arith.constant 0 : index
    %c0_7 = arith.constant 0 : index
    %3 = vector.load %arg1[%c0_5, %c0_6, %c0_7] : memref<8x16x8xbf16, #tpu.memory_space<vmem>>, vector<8x16x8xbf16>
    %4 = vector.shape_cast %3 : vector<8x16x8xbf16> to vector<128x8xbf16>
    %cst = arith.constant dense<0.000000e+00> : vector<128x256xf32>
    %5 = tpu.matmul %4, %0, %cst {dimension_numbers = #tpu.dot_dimension_numbers<[1], [0], [0], [1], [0, 0, 1, 1], [], []>} : vector<128x8xbf16>, vector<8x256xbf16>, vector<128x256xf32> -> vector<128x256xf32>
    %6 = vector.shape_cast %5 : vector<128x256xf32> to vector<8x16x256xf32>
    %7 = vector.shape_cast %2 : vector<1x256xf32> to vector<1x1x256xf32>
    %8 = vector.broadcast %7 : vector<1x1x256xf32> to vector<8x16x256xf32>
    %9 = arith.addf %6, %8 : vector<8x16x256xf32>
    %c0_8 = arith.constant 0 : index
    %c0_9 = arith.constant 0 : index
    %c0_10 = arith.constant 0 : index
    %10 = vector.load %arg6[%c0_8, %c0_9, %c0_10] : memref<8x16x256xf32, #tpu.memory_space<vmem>>, vector<8x16x256xf32>
    tpu.vector_store %arg6[%c0_8, %c0_9, %c0_10], %9 {strides = array<i32>} : memref<8x16x256xf32, #tpu.memory_space<vmem>>, vector<8x16x256xf32>,
    %cst_11 = arith.constant 0.000000e+00 : f32
    %11 = vector.broadcast %cst_11 : f32 to vector<16x64xf32>
    %cst_12 = arith.constant 0.000000e+00 : f32
    %12 = vector.broadcast %cst_12 : f32 to vector<16x64xf32>
    %c0_13 = arith.constant 0 : index
    %c0_14 = arith.constant 0 : index
    %c0_15 = arith.constant 0 : index
    %13 = vector.load %arg6[%c0_13, %c0_14, %c0_15] : memref<8x16x256xf32, #tpu.memory_space<vmem>>, vector<1x16x256xf32>
    %14 = vector.shape_cast %13 : vector<1x16x256xf32> to vector<16x256xf32>
    %15 = arith.truncf %11 : vector<16x64xf32> to vector<16x64xbf16>
    %cst_16 = arith.constant dense<0.000000e+00> : vector<16x256xf32>
    %16 = tpu.matmul %15, %1, %cst_16 {dimension_numbers = #tpu.dot_dimension_numbers<[1], [0], [0], [1], [0, 0, 1, 1], [], []>} : vector<16x64xbf16>, vector<64x256xbf16>, vector<16x256xf32> -> vector<16x256xf32>
    %17 = arith.addf %14, %16 : vector<16x256xf32>
    %18 = vector.extract_strided_slice %17 {offsets = [0, 0], sizes = [16, 64], strides = [1, 1]} : vector<16x256xf32> to vector<16x64xf32>
    %19 = arith.negf %18 : vector<16x64xf32>
    %20 = math.exp %19 : vector<16x64xf32>
    %cst_17 = arith.constant 1.000000e+00 : f32
    %21 = vector.broadcast %cst_17 : f32 to vector<16x64xf32>
    %22 = arith.addf %21, %20 : vector<16x64xf32>
    %23 = arith.divf %21, %22 : vector<16x64xf32>
    %24 = vector.extract_strided_slice %17 {offsets = [0, 64], sizes = [16, 64], strides = [1, 1]} : vector<16x256xf32> to vector<16x64xf32>
    %25 = arith.negf %24 : vector<16x64xf32>
    %26 = math.exp %25 : vector<16x64xf32>
    %cst_18 = arith.constant 1.000000e+00 : f32
    %27 = vector.broadcast %cst_18 : f32 to vector<16x64xf32>
    %28 = arith.addf %27, %26 : vector<16x64xf32>
    %29 = arith.divf %27, %28 : vector<16x64xf32>
    %30 = vector.extract_strided_slice %17 {offsets = [0, 128], sizes = [16, 64], strides = [1, 1]} : vector<16x256xf32> to vector<16x64xf32>
    %31 = math.tanh %30 : vector<16x64xf32>
    %32 = vector.extract_strided_slice %17 {offsets = [0, 192], sizes = [16, 64], strides = [1, 1]} : vector<16x256xf32> to vector<16x64xf32>
    %33 = arith.negf %32 : vector<16x64xf32>
    %34 = math.exp %33 : vector<16x64xf32>
    %cst_19 = arith.constant 1.000000e+00 : f32
    %35 = vector.broadcast %cst_19 : f32 to vector<16x64xf32>
    %36 = arith.addf %35, %34 : vector<16x64xf32>
    %37 = arith.divf %35, %36 : vector<16x64xf32>
    %38 = arith.mulf %29, %12 : vector<16x64xf32>
    %39 = arith.mulf %23, %31 : vector<16x64xf32>
    %40 = arith.addf %38, %39 : vector<16x64xf32>
    %41 = math.tanh %40 : vector<16x64xf32>
    %42 = arith.mulf %37, %41 : vector<16x64xf32>
    %c1 = arith.constant 1 : index
    %c0_20 = arith.constant 0 : index
    %c0_21 = arith.constant 0 : index
    %43 = vector.load %arg6[%c1, %c0_20, %c0_21] : memref<8x16x256xf32, #tpu.memory_space<vmem>>, vector<1x16x256xf32>
    %44 = vector.shape_cast %43 : vector<1x16x256xf32> to vector<16x256xf32>
    %45 = arith.truncf %42 : vector<16x64xf32> to vector<16x64xbf16>
    %cst_22 = arith.constant dense<0.000000e+00> : vector<16x256xf32>
    %46 = tpu.matmul %45, %1, %cst_22 {dimension_numbers = #tpu.dot_dimension_numbers<[1], [0], [0], [1], [0, 0, 1, 1], [], []>} : vector<16x64xbf16>, vector<64x256xbf16>, vector<16x256xf32> -> vector<16x256xf32>
    %47 = arith.addf %44, %46 : vector<16x256xf32>
    %48 = vector.extract_strided_slice %47 {offsets = [0, 0], sizes = [16, 64], strides = [1, 1]} : vector<16x256xf32> to vector<16x64xf32>
    %49 = arith.negf %48 : vector<16x64xf32>
    %50 = math.exp %49 : vector<16x64xf32>
    %cst_23 = arith.constant 1.000000e+00 : f32
    %51 = vector.broadcast %cst_23 : f32 to vector<16x64xf32>
    %52 = arith.addf %51, %50 : vector<16x64xf32>
    %53 = arith.divf %51, %52 : vector<16x64xf32>
    %54 = vector.extract_strided_slice %47 {offsets = [0, 64], sizes = [16, 64], strides = [1, 1]} : vector<16x256xf32> to vector<16x64xf32>
    %55 = arith.negf %54 : vector<16x64xf32>
    %56 = math.exp %55 : vector<16x64xf32>
    %cst_24 = arith.constant 1.000000e+00 : f32
    %57 = vector.broadcast %cst_24 : f32 to vector<16x64xf32>
    %58 = arith.addf %57, %56 : vector<16x64xf32>
    %59 = arith.divf %57, %58 : vector<16x64xf32>
    %60 = vector.extract_strided_slice %47 {offsets = [0, 128], sizes = [16, 64], strides = [1, 1]} : vector<16x256xf32> to vector<16x64xf32>
    %61 = math.tanh %60 : vector<16x64xf32>
    %62 = vector.extract_strided_slice %47 {offsets = [0, 192], sizes = [16, 64], strides = [1, 1]} : vector<16x256xf32> to vector<16x64xf32>
    %63 = arith.negf %62 : vector<16x64xf32>
    %64 = math.exp %63 : vector<16x64xf32>
    %cst_25 = arith.constant 1.000000e+00 : f32
    %65 = vector.broadcast %cst_25 : f32 to vector<16x64xf32>
    %66 = arith.addf %65, %64 : vector<16x64xf32>
    %67 = arith.divf %65, %66 : vector<16x64xf32>
    %68 = arith.mulf %59, %40 : vector<16x64xf32>
    %69 = arith.mulf %53, %61 : vector<16x64xf32>
    %70 = arith.addf %68, %69 : vector<16x64xf32>
    %71 = math.tanh %70 : vector<16x64xf32>
    %72 = arith.mulf %67, %71 : vector<16x64xf32>
    %c2 = arith.constant 2 : index
    %c0_26 = arith.constant 0 : index
    %c0_27 = arith.constant 0 : index
    %73 = vector.load %arg6[%c2, %c0_26, %c0_27] : memref<8x16x256xf32, #tpu.memory_space<vmem>>, vector<1x16x256xf32>
    %74 = vector.shape_cast %73 : vector<1x16x256xf32> to vector<16x256xf32>
    %75 = arith.truncf %72 : vector<16x64xf32> to vector<16x64xbf16>
    %cst_28 = arith.constant dense<0.000000e+00> : vector<16x256xf32>
    %76 = tpu.matmul %75, %1, %cst_28 {dimension_numbers = #tpu.dot_dimension_numbers<[1], [0], [0], [1], [0, 0, 1, 1], [], []>} : vector<16x64xbf16>, vector<64x256xbf16>, vector<16x256xf32> -> vector<16x256xf32>
    %77 = arith.addf %74, %76 : vector<16x256xf32>
    %78 = vector.extract_strided_slice %77 {offsets = [0, 0], sizes = [16, 64], strides = [1, 1]} : vector<16x256xf32> to vector<16x64xf32>
    %79 = arith.negf %78 : vector<16x64xf32>
    %80 = math.exp %79 : vector<16x64xf32>
    %cst_29 = arith.constant 1.000000e+00 : f32
    %81 = vector.broadcast %cst_29 : f32 to vector<16x64xf32>
    %82 = arith.addf %81, %80 : vector<16x64xf32>
    %83 = arith.divf %81, %82 : vector<16x64xf32>
    %84 = vector.extract_strided_slice %77 {offsets = [0, 64], sizes = [16, 64], strides = [1, 1]} : vector<16x256xf32> to vector<16x64xf32>
    %85 = arith.negf %84 : vector<16x64xf32>
    %86 = math.exp %85 : vector<16x64xf32>
    %cst_30 = arith.constant 1.000000e+00 : f32
    %87 = vector.broadcast %cst_30 : f32 to vector<16x64xf32>
    %88 = arith.addf %87, %86 : vector<16x64xf32>
    %89 = arith.divf %87, %88 : vector<16x64xf32>
    %90 = vector.extract_strided_slice %77 {offsets = [0, 128], sizes = [16, 64], strides = [1, 1]} : vector<16x256xf32> to vector<16x64xf32>
    %91 = math.tanh %90 : vector<16x64xf32>
    %92 = vector.extract_strided_slice %77 {offsets = [0, 192], sizes = [16, 64], strides = [1, 1]} : vector<16x256xf32> to vector<16x64xf32>
    %93 = arith.negf %92 : vector<16x64xf32>
    %94 = math.exp %93 : vector<16x64xf32>
    %cst_31 = arith.constant 1.000000e+00 : f32
    %95 = vector.broadcast %cst_31 : f32 to vector<16x64xf32>
    %96 = arith.addf %95, %94 : vector<16x64xf32>
    %97 = arith.divf %95, %96 : vector<16x64xf32>
    %98 = arith.mulf %89, %70 : vector<16x64xf32>
    %99 = arith.mulf %83, %91 : vector<16x64xf32>
    %100 = arith.addf %98, %99 : vector<16x64xf32>
    %101 = math.tanh %100 : vector<16x64xf32>
    %102 = arith.mulf %97, %101 : vector<16x64xf32>
    %c3 = arith.constant 3 : index
    %c0_32 = arith.constant 0 : index
    %c0_33 = arith.constant 0 : index
    %103 = vector.load %arg6[%c3, %c0_32, %c0_33] : memref<8x16x256xf32, #tpu.memory_space<vmem>>, vector<1x16x256xf32>
    %104 = vector.shape_cast %103 : vector<1x16x256xf32> to vector<16x256xf32>
    %105 = arith.truncf %102 : vector<16x64xf32> to vector<16x64xbf16>
    %cst_34 = arith.constant dense<0.000000e+00> : vector<16x256xf32>
    %106 = tpu.matmul %105, %1, %cst_34 {dimension_numbers = #tpu.dot_dimension_numbers<[1], [0], [0], [1], [0, 0, 1, 1], [], []>} : vector<16x64xbf16>, vector<64x256xbf16>, vector<16x256xf32> -> vector<16x256xf32>
    %107 = arith.addf %104, %106 : vector<16x256xf32>
    %108 = vector.extract_strided_slice %107 {offsets = [0, 0], sizes = [16, 64], strides = [1, 1]} : vector<16x256xf32> to vector<16x64xf32>
    %109 = arith.negf %108 : vector<16x64xf32>
    %110 = math.exp %109 : vector<16x64xf32>
    %cst_35 = arith.constant 1.000000e+00 : f32
    %111 = vector.broadcast %cst_35 : f32 to vector<16x64xf32>
    %112 = arith.addf %111, %110 : vector<16x64xf32>
    %113 = arith.divf %111, %112 : vector<16x64xf32>
    %114 = vector.extract_strided_slice %107 {offsets = [0, 64], sizes = [16, 64], strides = [1, 1]} : vector<16x256xf32> to vector<16x64xf32>
    %115 = arith.negf %114 : vector<16x64xf32>
    %116 = math.exp %115 : vector<16x64xf32>
    %cst_36 = arith.constant 1.000000e+00 : f32
    %117 = vector.broadcast %cst_36 : f32 to vector<16x64xf32>
    %118 = arith.addf %117, %116 : vector<16x64xf32>
    %119 = arith.divf %117, %118 : vector<16x64xf32>
    %120 = vector.extract_strided_slice %107 {offsets = [0, 128], sizes = [16, 64], strides = [1, 1]} : vector<16x256xf32> to vector<16x64xf32>
    %121 = math.tanh %120 : vector<16x64xf32>
    %122 = vector.extract_strided_slice %107 {offsets = [0, 192], sizes = [16, 64], strides = [1, 1]} : vector<16x256xf32> to vector<16x64xf32>
    %123 = arith.negf %122 : vector<16x64xf32>
    %124 = math.exp %123 : vector<16x64xf32>
    %cst_37 = arith.constant 1.000000e+00 : f32
    %125 = vector.broadcast %cst_37 : f32 to vector<16x64xf32>
    %126 = arith.addf %125, %124 : vector<16x64xf32>
    %127 = arith.divf %125, %126 : vector<16x64xf32>
    %128 = arith.mulf %119, %100 : vector<16x64xf32>
    %129 = arith.mulf %113, %121 : vector<16x64xf32>
    %130 = arith.addf %128, %129 : vector<16x64xf32>
    %131 = math.tanh %130 : vector<16x64xf32>
    %132 = arith.mulf %127, %131 : vector<16x64xf32>
    %c4 = arith.constant 4 : index
    %c0_38 = arith.constant 0 : index
    %c0_39 = arith.constant 0 : index
    %133 = vector.load %arg6[%c4, %c0_38, %c0_39] : memref<8x16x256xf32, #tpu.memory_space<vmem>>, vector<1x16x256xf32>
    %134 = vector.shape_cast %133 : vector<1x16x256xf32> to vector<16x256xf32>
    %135 = arith.truncf %132 : vector<16x64xf32> to vector<16x64xbf16>
    %cst_40 = arith.constant dense<0.000000e+00> : vector<16x256xf32>
    %136 = tpu.matmul %135, %1, %cst_40 {dimension_numbers = #tpu.dot_dimension_numbers<[1], [0], [0], [1], [0, 0, 1, 1], [], []>} : vector<16x64xbf16>, vector<64x256xbf16>, vector<16x256xf32> -> vector<16x256xf32>
    %137 = arith.addf %134, %136 : vector<16x256xf32>
    %138 = vector.extract_strided_slice %137 {offsets = [0, 0], sizes = [16, 64], strides = [1, 1]} : vector<16x256xf32> to vector<16x64xf32>
    %139 = arith.negf %138 : vector<16x64xf32>
    %140 = math.exp %139 : vector<16x64xf32>
    %cst_41 = arith.constant 1.000000e+00 : f32
    %141 = vector.broadcast %cst_41 : f32 to vector<16x64xf32>
    %142 = arith.addf %141, %140 : vector<16x64xf32>
    %143 = arith.divf %141, %142 : vector<16x64xf32>
    %144 = vector.extract_strided_slice %137 {offsets = [0, 64], sizes = [16, 64], strides = [1, 1]} : vector<16x256xf32> to vector<16x64xf32>
    %145 = arith.negf %144 : vector<16x64xf32>
    %146 = math.exp %145 : vector<16x64xf32>
    %cst_42 = arith.constant 1.000000e+00 : f32
    %147 = vector.broadcast %cst_42 : f32 to vector<16x64xf32>
    %148 = arith.addf %147, %146 : vector<16x64xf32>
    %149 = arith.divf %147, %148 : vector<16x64xf32>
    %150 = vector.extract_strided_slice %137 {offsets = [0, 128], sizes = [16, 64], strides = [1, 1]} : vector<16x256xf32> to vector<16x64xf32>
    %151 = math.tanh %150 : vector<16x64xf32>
    %152 = vector.extract_strided_slice %137 {offsets = [0, 192], sizes = [16, 64], strides = [1, 1]} : vector<16x256xf32> to vector<16x64xf32>
    %153 = arith.negf %152 : vector<16x64xf32>
    %154 = math.exp %153 : vector<16x64xf32>
    %cst_43 = arith.constant 1.000000e+00 : f32
    %155 = vector.broadcast %cst_43 : f32 to vector<16x64xf32>
    %156 = arith.addf %155, %154 : vector<16x64xf32>
    %157 = arith.divf %155, %156 : vector<16x64xf32>
    %158 = arith.mulf %149, %130 : vector<16x64xf32>
    %159 = arith.mulf %143, %151 : vector<16x64xf32>
    %160 = arith.addf %158, %159 : vector<16x64xf32>
    %161 = math.tanh %160 : vector<16x64xf32>
    %162 = arith.mulf %157, %161 : vector<16x64xf32>
    %c5 = arith.constant 5 : index
    %c0_44 = arith.constant 0 : index
    %c0_45 = arith.constant 0 : index
    %163 = vector.load %arg6[%c5, %c0_44, %c0_45] : memref<8x16x256xf32, #tpu.memory_space<vmem>>, vector<1x16x256xf32>
    %164 = vector.shape_cast %163 : vector<1x16x256xf32> to vector<16x256xf32>
    %165 = arith.truncf %162 : vector<16x64xf32> to vector<16x64xbf16>
    %cst_46 = arith.constant dense<0.000000e+00> : vector<16x256xf32>
    %166 = tpu.matmul %165, %1, %cst_46 {dimension_numbers = #tpu.dot_dimension_numbers<[1], [0], [0], [1], [0, 0, 1, 1], [], []>} : vector<16x64xbf16>, vector<64x256xbf16>, vector<16x256xf32> -> vector<16x256xf32>
    %167 = arith.addf %164, %166 : vector<16x256xf32>
    %168 = vector.extract_strided_slice %167 {offsets = [0, 0], sizes = [16, 64], strides = [1, 1]} : vector<16x256xf32> to vector<16x64xf32>
    %169 = arith.negf %168 : vector<16x64xf32>
    %170 = math.exp %169 : vector<16x64xf32>
    %cst_47 = arith.constant 1.000000e+00 : f32
    %171 = vector.broadcast %cst_47 : f32 to vector<16x64xf32>
    %172 = arith.addf %171, %170 : vector<16x64xf32>
    %173 = arith.divf %171, %172 : vector<16x64xf32>
    %174 = vector.extract_strided_slice %167 {offsets = [0, 64], sizes = [16, 64], strides = [1, 1]} : vector<16x256xf32> to vector<16x64xf32>
    %175 = arith.negf %174 : vector<16x64xf32>
    %176 = math.exp %175 : vector<16x64xf32>
    %cst_48 = arith.constant 1.000000e+00 : f32
    %177 = vector.broadcast %cst_48 : f32 to vector<16x64xf32>
    %178 = arith.addf %177, %176 : vector<16x64xf32>
    %179 = arith.divf %177, %178 : vector<16x64xf32>
    %180 = vector.extract_strided_slice %167 {offsets = [0, 128], sizes = [16, 64], strides = [1, 1]} : vector<16x256xf32> to vector<16x64xf32>
    %181 = math.tanh %180 : vector<16x64xf32>
    %182 = vector.extract_strided_slice %167 {offsets = [0, 192], sizes = [16, 64], strides = [1, 1]} : vector<16x256xf32> to vector<16x64xf32>
    %183 = arith.negf %182 : vector<16x64xf32>
    %184 = math.exp %183 : vector<16x64xf32>
    %cst_49 = arith.constant 1.000000e+00 : f32
    %185 = vector.broadcast %cst_49 : f32 to vector<16x64xf32>
    %186 = arith.addf %185, %184 : vector<16x64xf32>
    %187 = arith.divf %185, %186 : vector<16x64xf32>
    %188 = arith.mulf %179, %160 : vector<16x64xf32>
    %189 = arith.mulf %173, %181 : vector<16x64xf32>
    %190 = arith.addf %188, %189 : vector<16x64xf32>
    %191 = math.tanh %190 : vector<16x64xf32>
    %192 = arith.mulf %187, %191 : vector<16x64xf32>
    %c6 = arith.constant 6 : index
    %c0_50 = arith.constant 0 : index
    %c0_51 = arith.constant 0 : index
    %193 = vector.load %arg6[%c6, %c0_50, %c0_51] : memref<8x16x256xf32, #tpu.memory_space<vmem>>, vector<1x16x256xf32>
    %194 = vector.shape_cast %193 : vector<1x16x256xf32> to vector<16x256xf32>
    %195 = arith.truncf %192 : vector<16x64xf32> to vector<16x64xbf16>
    %cst_52 = arith.constant dense<0.000000e+00> : vector<16x256xf32>
    %196 = tpu.matmul %195, %1, %cst_52 {dimension_numbers = #tpu.dot_dimension_numbers<[1], [0], [0], [1], [0, 0, 1, 1], [], []>} : vector<16x64xbf16>, vector<64x256xbf16>, vector<16x256xf32> -> vector<16x256xf32>
    %197 = arith.addf %194, %196 : vector<16x256xf32>
    %198 = vector.extract_strided_slice %197 {offsets = [0, 0], sizes = [16, 64], strides = [1, 1]} : vector<16x256xf32> to vector<16x64xf32>
    %199 = arith.negf %198 : vector<16x64xf32>
    %200 = math.exp %199 : vector<16x64xf32>
    %cst_53 = arith.constant 1.000000e+00 : f32
    %201 = vector.broadcast %cst_53 : f32 to vector<16x64xf32>
    %202 = arith.addf %201, %200 : vector<16x64xf32>
    %203 = arith.divf %201, %202 : vector<16x64xf32>
    %204 = vector.extract_strided_slice %197 {offsets = [0, 64], sizes = [16, 64], strides = [1, 1]} : vector<16x256xf32> to vector<16x64xf32>
    %205 = arith.negf %204 : vector<16x64xf32>
    %206 = math.exp %205 : vector<16x64xf32>
    %cst_54 = arith.constant 1.000000e+00 : f32
    %207 = vector.broadcast %cst_54 : f32 to vector<16x64xf32>
    %208 = arith.addf %207, %206 : vector<16x64xf32>
    %209 = arith.divf %207, %208 : vector<16x64xf32>
    %210 = vector.extract_strided_slice %197 {offsets = [0, 128], sizes = [16, 64], strides = [1, 1]} : vector<16x256xf32> to vector<16x64xf32>
    %211 = math.tanh %210 : vector<16x64xf32>
    %212 = vector.extract_strided_slice %197 {offsets = [0, 192], sizes = [16, 64], strides = [1, 1]} : vector<16x256xf32> to vector<16x64xf32>
    %213 = arith.negf %212 : vector<16x64xf32>
    %214 = math.exp %213 : vector<16x64xf32>
    %cst_55 = arith.constant 1.000000e+00 : f32
    %215 = vector.broadcast %cst_55 : f32 to vector<16x64xf32>
    %216 = arith.addf %215, %214 : vector<16x64xf32>
    %217 = arith.divf %215, %216 : vector<16x64xf32>
    %218 = arith.mulf %209, %190 : vector<16x64xf32>
    %219 = arith.mulf %203, %211 : vector<16x64xf32>
    %220 = arith.addf %218, %219 : vector<16x64xf32>
    %221 = math.tanh %220 : vector<16x64xf32>
    %222 = arith.mulf %217, %221 : vector<16x64xf32>
    %c7 = arith.constant 7 : index
    %c0_56 = arith.constant 0 : index
    %c0_57 = arith.constant 0 : index
    %223 = vector.load %arg6[%c7, %c0_56, %c0_57] : memref<8x16x256xf32, #tpu.memory_space<vmem>>, vector<1x16x256xf32>
    %224 = vector.shape_cast %223 : vector<1x16x256xf32> to vector<16x256xf32>
    %225 = arith.truncf %222 : vector<16x64xf32> to vector<16x64xbf16>
    %cst_58 = arith.constant dense<0.000000e+00> : vector<16x256xf32>
    %226 = tpu.matmul %225, %1, %cst_58 {dimension_numbers = #tpu.dot_dimension_numbers<[1], [0], [0], [1], [0, 0, 1, 1], [], []>} : vector<16x64xbf16>, vector<64x256xbf16>, vector<16x256xf32> -> vector<16x256xf32>
    %227 = arith.addf %224, %226 : vector<16x256xf32>
    %228 = vector.extract_strided_slice %227 {offsets = [0, 0], sizes = [16, 64], strides = [1, 1]} : vector<16x256xf32> to vector<16x64xf32>
    %229 = arith.negf %228 : vector<16x64xf32>
    %230 = math.exp %229 : vector<16x64xf32>
    %cst_59 = arith.constant 1.000000e+00 : f32
    %231 = vector.broadcast %cst_59 : f32 to vector<16x64xf32>
    %232 = arith.addf %231, %230 : vector<16x64xf32>
    %233 = arith.divf %231, %232 : vector<16x64xf32>
    %234 = vector.extract_strided_slice %227 {offsets = [0, 64], sizes = [16, 64], strides = [1, 1]} : vector<16x256xf32> to vector<16x64xf32>
    %235 = arith.negf %234 : vector<16x64xf32>
    %236 = math.exp %235 : vector<16x64xf32>
    %cst_60 = arith.constant 1.000000e+00 : f32
    %237 = vector.broadcast %cst_60 : f32 to vector<16x64xf32>
    %238 = arith.addf %237, %236 : vector<16x64xf32>
    %239 = arith.divf %237, %238 : vector<16x64xf32>
    %240 = vector.extract_strided_slice %227 {offsets = [0, 128], sizes = [16, 64], strides = [1, 1]} : vector<16x256xf32> to vector<16x64xf32>
    %241 = math.tanh %240 : vector<16x64xf32>
    %242 = vector.extract_strided_slice %227 {offsets = [0, 192], sizes = [16, 64], strides = [1, 1]} : vector<16x256xf32> to vector<16x64xf32>
    %243 = arith.negf %242 : vector<16x64xf32>
    %244 = math.exp %243 : vector<16x64xf32>
    %cst_61 = arith.constant 1.000000e+00 : f32
    %245 = vector.broadcast %cst_61 : f32 to vector<16x64xf32>
    %246 = arith.addf %245, %244 : vector<16x64xf32>
    %247 = arith.divf %245, %246 : vector<16x64xf32>
    %248 = arith.mulf %239, %220 : vector<16x64xf32>
    %249 = arith.mulf %233, %241 : vector<16x64xf32>
    %250 = arith.addf %248, %249 : vector<16x64xf32>
    %251 = math.tanh %250 : vector<16x64xf32>
    %252 = arith.mulf %247, %251 : vector<16x64xf32>
    %c0_62 = arith.constant 0 : index
    %c0_63 = arith.constant 0 : index
    %253 = vector.load %arg5[%c0_62, %c0_63] : memref<16x64xf32, #tpu.memory_space<vmem>>, vector<16x64xf32>
    tpu.vector_store %arg5[%c0_62, %c0_63], %252 {strides = array<i32>} : memref<16x64xf32, #tpu.memory_space<vmem>>, vector<16x64xf32>,
    return
  }
  func.func @transform_0(%arg0: i32) -> (i32, i32, i32) {
    %c0_i32 = arith.constant 0 : i32
    %c0_i32_0 = arith.constant 0 : i32
    %c0_i32_1 = arith.constant 0 : i32
    return %c0_i32, %arg0, %c0_i32_0 : i32, i32, i32
  }
  func.func @transform_1(%arg0: i32) -> (i32, i32) {
    %c0_i32 = arith.constant 0 : i32
    %c0_i32_0 = arith.constant 0 : i32
    %c0_i32_1 = arith.constant 0 : i32
    return %c0_i32, %c0_i32_0 : i32, i32
  }
  func.func @transform_2(%arg0: i32) -> (i32, i32) {
    %c0_i32 = arith.constant 0 : i32
    %c0_i32_0 = arith.constant 0 : i32
    %c0_i32_1 = arith.constant 0 : i32
    return %c0_i32, %c0_i32_0 : i32, i32
  }
  func.func @transform_3(%arg0: i32) -> (i32, i32) {
    %c0_i32 = arith.constant 0 : i32
    %c0_i32_0 = arith.constant 0 : i32
    %c0_i32_1 = arith.constant 0 : i32
    return %c0_i32, %c0_i32_0 : i32, i32
  }
  func.func @transform_4(%arg0: i32) -> (i32, i32) {
    %c0_i32 = arith.constant 0 : i32
    %c0_i32_0 = arith.constant 0 : i32
    return %arg0, %c0_i32 : i32, i32
  }
}

module attributes {stable_mosaic.version = 11 : i64} {
  func.func @bn_fc_head_kernel(%arg0: memref<16x64xf32, #tpu.memory_space<vmem>>, %arg1: memref<1x64xf32, #tpu.memory_space<vmem>>, %arg2: memref<1x64xf32, #tpu.memory_space<vmem>>, %arg3: memref<64x32xf32, #tpu.memory_space<vmem>>, %arg4: memref<1x32xf32, #tpu.memory_space<vmem>>, %arg5: memref<32x1xf32, #tpu.memory_space<vmem>>, %arg6: memref<1x1xf32, #tpu.memory_space<vmem>>, %arg7: memref<16x1xf32, #tpu.memory_space<vmem>>) attributes {dimension_semantics = [], scalar_prefetch = 0 : i64, scratch_operands = 0 : i64, tpu.core_type = #tpu.core_type<tc>} {
    %c0 = arith.constant 0 : index
    %c0_0 = arith.constant 0 : index
    %0 = vector.load %arg0[%c0, %c0_0] : memref<16x64xf32, #tpu.memory_space<vmem>>, vector<16x64xf32>
    %1 = tpu.iota {dimensions = array<i32: 0>} : vector<16x64xi32>
    %c16_i32 = arith.constant 16 : i32
    %2 = vector.broadcast %c16_i32 : i32 to vector<16x64xi32>
    %3 = arith.cmpi slt, %1, %2 : vector<16x64xi32>
    %4 = arith.extui %3 : vector<16x64xi1> to vector<16x64xi32>
    %5 = arith.sitofp %4 : vector<16x64xi32> to vector<16x64xf32>
    %6 = arith.mulf %0, %5 : vector<16x64xf32>
    %cst = arith.constant dense<0.000000e+00> : vector<64xf32>
    %7 = vector.multi_reduction <add>, %6, %cst [0] : vector<16x64xf32> to vector<64xf32>
    %8 = vector.shape_cast %7 : vector<64xf32> to vector<1x64xf32>
    %cst_1 = arith.constant 6.250000e-02 : f32
    %9 = vector.broadcast %cst_1 : f32 to vector<1x64xf32>
    %10 = arith.mulf %8, %9 : vector<1x64xf32>
    %11 = vector.broadcast %10 : vector<1x64xf32> to vector<16x64xf32>
    %12 = arith.subf %0, %11 : vector<16x64xf32>
    %13 = arith.mulf %12, %5 : vector<16x64xf32>
    %14 = arith.mulf %13, %13 : vector<16x64xf32>
    %cst_2 = arith.constant dense<0.000000e+00> : vector<64xf32>
    %15 = vector.multi_reduction <add>, %14, %cst_2 [0] : vector<16x64xf32> to vector<64xf32>
    %16 = vector.shape_cast %15 : vector<64xf32> to vector<1x64xf32>
    %cst_3 = arith.constant 6.250000e-02 : f32
    %17 = vector.broadcast %cst_3 : f32 to vector<1x64xf32>
    %18 = arith.mulf %16, %17 : vector<1x64xf32>
    %19 = vector.broadcast %10 : vector<1x64xf32> to vector<16x64xf32>
    %20 = arith.subf %0, %19 : vector<16x64xf32>
    %cst_4 = arith.constant 9.99999974E-6 : f32
    %21 = vector.broadcast %cst_4 : f32 to vector<1x64xf32>
    %22 = arith.addf %18, %21 : vector<1x64xf32>
    %23 = math.rsqrt %22 : vector<1x64xf32>
    %24 = vector.broadcast %23 : vector<1x64xf32> to vector<16x64xf32>
    %25 = arith.mulf %20, %24 : vector<16x64xf32>
    %c0_5 = arith.constant 0 : index
    %c0_6 = arith.constant 0 : index
    %26 = vector.load %arg1[%c0_5, %c0_6] : memref<1x64xf32, #tpu.memory_space<vmem>>, vector<1x64xf32>
    %27 = vector.broadcast %26 : vector<1x64xf32> to vector<16x64xf32>
    %28 = arith.mulf %25, %27 : vector<16x64xf32>
    %c0_7 = arith.constant 0 : index
    %c0_8 = arith.constant 0 : index
    %29 = vector.load %arg2[%c0_7, %c0_8] : memref<1x64xf32, #tpu.memory_space<vmem>>, vector<1x64xf32>
    %30 = vector.broadcast %29 : vector<1x64xf32> to vector<16x64xf32>
    %31 = arith.addf %28, %30 : vector<16x64xf32>
    %c0_9 = arith.constant 0 : index
    %c0_10 = arith.constant 0 : index
    %32 = vector.load %arg3[%c0_9, %c0_10] : memref<64x32xf32, #tpu.memory_space<vmem>>, vector<64x32xf32>
    %cst_11 = arith.constant dense<0.000000e+00> : vector<16x32xf32>
    %33 = tpu.matmul %31, %32, %cst_11 {dimension_numbers = #tpu.dot_dimension_numbers<[1], [0], [0], [1], [0, 0, 1, 1], [], []>} : vector<16x64xf32>, vector<64x32xf32>, vector<16x32xf32> -> vector<16x32xf32>
    %c0_12 = arith.constant 0 : index
    %c0_13 = arith.constant 0 : index
    %34 = vector.load %arg4[%c0_12, %c0_13] : memref<1x32xf32, #tpu.memory_space<vmem>>, vector<1x32xf32>
    %35 = vector.broadcast %34 : vector<1x32xf32> to vector<16x32xf32>
    %36 = arith.addf %33, %35 : vector<16x32xf32>
    %cst_14 = arith.constant 0.000000e+00 : f32
    %37 = vector.broadcast %cst_14 : f32 to vector<16x32xf32>
    %38 = arith.maximumf %36, %37 : vector<16x32xf32>
    %c0_15 = arith.constant 0 : index
    %c0_16 = arith.constant 0 : index
    %39 = vector.load %arg5[%c0_15, %c0_16] : memref<32x1xf32, #tpu.memory_space<vmem>>, vector<32x1xf32>
    %cst_17 = arith.constant dense<0.000000e+00> : vector<16x1xf32>
    %40 = tpu.matmul %38, %39, %cst_17 {dimension_numbers = #tpu.dot_dimension_numbers<[1], [0], [0], [1], [0, 0, 1, 1], [], []>} : vector<16x32xf32>, vector<32x1xf32>, vector<16x1xf32> -> vector<16x1xf32>
    %c0_18 = arith.constant 0 : index
    %c0_19 = arith.constant 0 : index
    %41 = vector.load %arg6[%c0_18, %c0_19] : memref<1x1xf32, #tpu.memory_space<vmem>>, vector<1x1xf32>
    %42 = vector.broadcast %41 : vector<1x1xf32> to vector<16x1xf32>
    %43 = arith.addf %40, %42 : vector<16x1xf32>
    %c0_20 = arith.constant 0 : index
    %c0_21 = arith.constant 0 : index
    %44 = vector.load %arg7[%c0_20, %c0_21] : memref<16x1xf32, #tpu.memory_space<vmem>>, vector<16x1xf32>
    tpu.vector_store %arg7[%c0_20, %c0_21], %43 {strides = array<i32>} : memref<16x1xf32, #tpu.memory_space<vmem>>, vector<16x1xf32>,
    return
  }
}

</mosaic_0001>

<llo_original>
// kernel: squeeze.1
$region0: #{squeeze.1}
  %s0 = inlined_call_operand.vmem [shape: f32[16], index: 0, kind: input, shape index: {}]
  %s1 = inlined_call_operand.hbm [shape: f32[2,8], index: 1, kind: output, shape index: {}]
  $region1: #{squeeze.1} parent=0
    #allocation0 [shape = 'u8[1024]{0}', space=vmem, size = 0x400, scoped, tag = 'operand span for operand 1']
    #allocation1 [shape = 's32[1]{0}', space=sflag, size = 0x4, scoped, tag = 'scoped memory for squeeze.1']
    #allocation2 [shape = 'u8[4096]{0}', space=vmem, size = 0x1000, scoped, tag = 'scoped mem for output reshape']
    #allocation3 [shape = 'u8[4096]{0}', space=vmem, size = 0x1000, scoped, tag = 'scoped mem for input reshape']
    %2 = vsyncpa [#allocation1], 0
    %s4 = ssub.s32 2, 1
    %v5 = vld [vmem:[%s0] sm:%s4]
    %6 = vst [vmem:[#allocation3] sm:%s4] %v5
    %v7 = vld [vmem:[#allocation3] sm:$0x1]
    %vm8 = vcmask 64512
    %9 = vst.msk [vmem:[#allocation2] sm:$0x1] %vm8, %v7
    %v10 = vld [vmem:[#allocation3] sm:$0x1]
    %11 = vrot.lane.b32.xlu0 %v10, 120
    %v12 = vpop.permute.xlu0 %11
    %vm13 = vcmask 64512
    %s14 = scalar_lea.vmem [#allocation2], 1
    %15 = vst.msk [vmem:[%s14] sm:$0x1] %vm13, %v12
    %s17 = ssub.s32 4, 1
    %v18 = vld [vmem:[#allocation2] sm:%s17]
    %s20 = ssub.s32 4, 1
    %21 = vst [vmem:[#allocation0] sm:%s20] %v18
    %23 = vsyncadd [#allocation1], 0
    %s25 = sshll.u32 [#allocation0], 4
    %s26 = int_to_ptr.vmem [resolvable:$true] %s25
    %s27 = sshll.u32 %s1, 4
    %s28 = int_to_ptr.hbm [resolvable:$true] %s27
    %30 = dma.vmem_to_hbm [thread:$0]  %s26, 32, %s28, [#allocation1]
    %32 = dma.done [#allocation1], 32
    %33 = vsyncpa [#allocation1], 1

// kernel: two_layer_lstm_forward.3
$region0: #{two_layer_lstm_forward.3}
  #allocation0 [shape = 'u32[]', space=smem, size = 0x4, offset = 0x4, fixed_abs, tag = 'smem constant byte address 0x4 - core index']
  #allocation1 [shape = 'u32[72,128]{1,0:T(1,128)}', space=vmem, size = 0x9000, scoped, tag = 'internal scratch']
  #allocation2 [shape = 'f32[1,1]{1,0:T(1,128)S(1)}', space=vmem, size = 0x200, scoped, tag = 'scoped memory for two_layer_lstm_forward.3']
  %s0 = inlined_call_operand.vmem [shape: f32[16,64], index: 0, kind: input, shape index: {}]
  %s1 = inlined_call_operand.vmem [shape: f32[1,64], index: 1, kind: input, shape index: {}]
  %s2 = inlined_call_operand.vmem [shape: f32[1,64], index: 2, kind: input, shape index: {}]
  %s3 = inlined_call_operand.vmem [shape: f32[64,32], index: 3, kind: input, shape index: {}]
  %s4 = inlined_call_operand.vmem [shape: f32[1,32], index: 4, kind: input, shape index: {}]
  %s5 = inlined_call_operand.vmem [shape: f32[32,1], index: 5, kind: input, shape index: {}]
  %s6 = inlined_call_operand.<no memory space> [shape: f32[1,1], index: 6, kind: input, shape index: {}]
  %s7 = inlined_call_operand.vmem [shape: f32[16,1], index: 7, kind: output, shape index: {}]
  %s8 = sld [smem:[#allocation0]]
  $region38: #{two_layer_lstm_forward.3} parent=0
    _
  %s10 = ssub.s32 1, %s8
  %s11 = scalar_select 0, %s10, %s8
  %v12 = vstv %s6
  %13 = vst [vmem:[#allocation2] sm:$0x1] %v12
  // Predicated region
  $region2: #{two_layer_lstm_forward.3} parent=0 // pred_check
    _
  $region3: #{two_layer_lstm_forward.3} parent=0 // pred_check_branch
    %15 = sbr.rel (0) target = $region5
  $region4: #{two_layer_lstm_forward.3} parent=0 // pred_region
    _
  $region5: #{two_layer_lstm_forward.3} parent=0 // pred_fallthru
    _
  // Predicated region
  $region6: #{two_layer_lstm_forward.3} parent=0 // pred_check
    _
  $region7: #{two_layer_lstm_forward.3} parent=0 // pred_check_branch
    %17 = sbr.rel (0) target = $region9
  $region8: #{two_layer_lstm_forward.3} parent=0 // pred_region
    _
  $region9: #{two_layer_lstm_forward.3} parent=0 // pred_fallthru
    _
  // Predicated region
  $region10: #{two_layer_lstm_forward.3} parent=0 // pred_check
    _
  $region11: #{two_layer_lstm_forward.3} parent=0 // pred_check_branch
    %19 = sbr.rel (0) target = $region13
  $region12: #{two_layer_lstm_forward.3} parent=0 // pred_region
    _
  $region13: #{two_layer_lstm_forward.3} parent=0 // pred_fallthru
    _
  // Predicated region
  $region14: #{two_layer_lstm_forward.3} parent=0 // pred_check
    _
  $region15: #{two_layer_lstm_forward.3} parent=0 // pred_check_branch
    %21 = sbr.rel (0) target = $region17
  $region16: #{two_layer_lstm_forward.3} parent=0 // pred_region
    _
  $region17: #{two_layer_lstm_forward.3} parent=0 // pred_fallthru
    _
  // Predicated region
  $region18: #{two_layer_lstm_forward.3} parent=0 // pred_check
    _
  $region19: #{two_layer_lstm_forward.3} parent=0 // pred_check_branch
    %23 = sbr.rel (0) target = $region21
  $region20: #{two_layer_lstm_forward.3} parent=0 // pred_region
    _
  $region21: #{two_layer_lstm_forward.3} parent=0 // pred_fallthru
    _
  // Predicated region
  $region22: #{two_layer_lstm_forward.3} parent=0 // pred_check
    _
  $region23: #{two_layer_lstm_forward.3} parent=0 // pred_check_branch
    %25 = sbr.rel (0) target = $region25
  $region24: #{two_layer_lstm_forward.3} parent=0 // pred_region
    _
  $region25: #{two_layer_lstm_forward.3} parent=0 // pred_fallthru
    _
  // Predicated region
  $region26: #{two_layer_lstm_forward.3} parent=0 // pred_check
    _
  $region27: #{two_layer_lstm_forward.3} parent=0 // pred_check_branch
    %27 = sbr.rel (0) target = $region29
  $region28: #{two_layer_lstm_forward.3} parent=0 // pred_region
    _
  $region29: #{two_layer_lstm_forward.3} parent=0 // pred_fallthru
    _
  %v28 = vld [vmem:[%s0] sm:$0xff]
  %v29 = vld [vmem:[%s0 + $0x8] sm:$0xff]
  %v30 = vlaneseq
  %v31 = vshrl.u32 %v30, 7
  %v32 = vadd.s32 %v31, 8
  %vm33 = vcmp.lt.s32.totalorder %v31, 16
  %vm34 = vcmp.lt.s32.totalorder %v32, 16
  %v35 = vsel %vm33, 1, 0
  %v36 = vsel %vm34, 1, 0
  %v37 = vcvt.s32.f32 %v35
  %v38 = vcvt.s32.f32 %v36
  %v39 = vmul.f32 %v28, %v37
  %v40 = vmul.f32 %v29, %v38
  %vm41 = vcmask 523264
  %v42 = vsel %vm41, %v39, 0.0
  %v43 = vsel %vm41, %v40, 0.0
  %v44 = vadd.f32 %v42, %v43
  %v45 = vrot.slane %v44, 4
  %v46 = vadd.f32 %v44, %v45
  %v47 = vrot.slane %v46, 2
  %v48 = vadd.f32 %v46, %v47
  %v49 = vrot.slane %v48, 1
  %v50 = vadd.f32 %v48, %v49
  %v51 = vmul.f32 %v50, 0.0625
  %v52 = vsub.f32 %v28, %v51
  %v53 = vsub.f32 %v29, %v51
  %v54 = vmul.f32 %v52, %v37
  %v55 = vmul.f32 %v53, %v38
  %v56 = vmul.f32 %v54, %v54
  %v57 = vmul.f32 %v55, %v55
  %v58 = vsel %vm41, %v56, 0.0
  %v59 = vsel %vm41, %v57, 0.0
  %v60 = vadd.f32 %v58, %v59
  %v61 = vrot.slane %v60, 4
  %v62 = vadd.f32 %v60, %v61
  %v63 = vrot.slane %v62, 2
  %v64 = vadd.f32 %v62, %v63
  %v65 = vrot.slane %v64, 1
  %v66 = vadd.f32 %v64, %v65
  %v67 = vmul.f32 %v66, 0.0625
  %v68 = vadd.f32 %v67, 1e-05
  %v69 = vrsqrt.pop %v68
  %v70 = vmul.f32 %v69, %v68
  %v71 = vmul.f32 %v70, %v69
  %v72 = vmul.f32 0.5, %v71
  %v73 = vsub.f32 1.5, %v72
  %v74 = vmul.f32 %v69, %v73
  %vm75 = vweird.f32 %v68
  %vm76 = vweird.f32 %v69
  %vm77 = vmor %vm75, %vm76
  %v78 = vsel %vm77, %v69, %v74
  %v79 = vmul.f32 %v52, %v78
  %v80 = vmul.f32 %v53, %v78
  %v81 = vld [vmem:[%s1] sm:$0x1]
  %v83 = vperm.slane %v81, 0
  %v85 = vmul.f32 %v79, %v83
  %v86 = vmul.f32 %v80, %v83
  %v87 = vld [vmem:[%s2] sm:$0x1]
  %v89 = vperm.slane %v87, 0
  %v91 = vadd.f32 %v85, %v89
  %v92 = vadd.f32 %v86, %v89
  %v93 = vld [vmem:[%s3] sm:$0xff]
  %v94 = vld [vmem:[%s3 + $0x8] sm:$0xff]
  %v95 = vld [vmem:[%s3 + $0x10] sm:$0xff]
  %v96 = vld [vmem:[%s3 + $0x18] sm:$0xff]
  %v97 = vld [vmem:[%s3 + $0x20] sm:$0xff]
  %v98 = vld [vmem:[%s3 + $0x28] sm:$0xff]
  %v99 = vld [vmem:[%s3 + $0x30] sm:$0xff]
  %v100 = vld [vmem:[%s3 + $0x38] sm:$0xff]
  %v101 = vld [vmem:[%s4] sm:$0x1]
  %v103 = vperm.slane %v101, 0
  %v106 = vsel %vm41, %v91, 0
  %v109 = vsel %vm41, %v92, 0
  %111 = vmatpush.msra.mxu0 0.0
  %112 = vmatpush.msra.mxu0 0.0
  %113 = vmatpush.msra.mxu0 0.0
  %114 = vmatpush.msra.mxu0 0.0
  %115 = vmatpush.msra.mxu0 0.0
  %116 = vmatpush.msra.mxu0 0.0
  %117 = vmatpush.msra.mxu0 0.0
  %118 = vmatpush.msra.mxu0 0.0
  %119 = vmatpush.msra.mxu0 %v100
  %120 = vmatpush.msra.mxu0 %v99
  %121 = vmatpush.msra.mxu0 %v98
  %122 = vmatpush.msra.mxu0 %v97
  %123 = vmatpush.msra.mxu0 %v96
  %124 = vmatpush.msra.mxu0 %v95
  %125 = vmatpush.msra.mxu0 %v94
  %126 = vmatpush.msra.mxu0 %v93
  %127 = vmatmul.f32.gmra.mxu0 %v106
  %v128 = vpop.f32.mrf.mxu0
  %v129 = vadd.f32 %v103, %v128
  %130 = vmatmul.f32.gmra.mxu0 %v109
  %v131 = vpop.f32.mrf.mxu0
  %v132 = vadd.f32 %v103, %v131
  %133 = vdwg.mxu0
  %v134 = vmax.f32 %v129, 0.0
  %v135 = vmax.f32 %v132, 0.0
  %v136 = vld [vmem:[%s5] sm:$0xff]
  %v137 = vld [vmem:[%s5 + $0x8] sm:$0xff]
  %v138 = vld [vmem:[%s5 + $0x10] sm:$0xff]
  %v139 = vld [vmem:[%s5 + $0x18] sm:$0xff]
  %v140 = vld [vmem:[#allocation2] sm:$0x1]
  %v142 = vperm.slane %v140, 0
  %vm144 = vcmask 261120
  %v146 = vsel %vm144, %v134, 0
  %v149 = vsel %vm144, %v135, 0
  %151 = vmatpush.msra.mxu0 0.0
  %152 = vmatpush.msra.mxu0 0.0
  %153 = vmatpush.msra.mxu0 0.0
  %154 = vmatpush.msra.mxu0 0.0
  %155 = vmatpush.msra.mxu0 0.0
  %156 = vmatpush.msra.mxu0 0.0
  %157 = vmatpush.msra.mxu0 0.0
  %158 = vmatpush.msra.mxu0 0.0
  %159 = vmatpush.msra.mxu0 0.0
  %160 = vmatpush.msra.mxu0 0.0
  %161 = vmatpush.msra.mxu0 0.0
  %162 = vmatpush.msra.mxu0 0.0
  %163 = vmatpush.msra.mxu0 %v139
  %164 = vmatpush.msra.mxu0 %v138
  %165 = vmatpush.msra.mxu0 %v137
  %166 = vmatpush.msra.mxu0 %v136
  %167 = vmatmul.f32.gmra.mxu0 %v146
  %v168 = vpop.f32.mrf.mxu0
  %v169 = vadd.f32 %v142, %v168
  %170 = vmatmul.f32.gmra.mxu0 %v149
  %v171 = vpop.f32.mrf.mxu0
  %v172 = vadd.f32 %v142, %v171
  %173 = vdwg.mxu0
  %vm174 = vcmask 7168
  %175 = vst.msk [vmem:[%s7] sm:$0xff] %vm174, %v169
  %176 = vst.msk [vmem:[%s7 + $0x8] sm:$0xff] %vm174, %v172
  // Predicated region
  $region30: #{two_layer_lstm_forward.3} parent=0 // pred_check
    _
  $region31: #{two_layer_lstm_forward.3} parent=0 // pred_check_branch
    %178 = sbr.rel (0) target = $region33
  $region32: #{two_layer_lstm_forward.3} parent=0 // pred_region
    _
  $region33: #{two_layer_lstm_forward.3} parent=0 // pred_fallthru
    _
  // Predicated region
  $region34: #{two_layer_lstm_forward.3} parent=0 // pred_check
    _
  $region35: #{two_layer_lstm_forward.3} parent=0 // pred_check_branch
    %180 = sbr.rel (0) target = $region37
  $region36: #{two_layer_lstm_forward.3} parent=0 // pred_region
    _
  $region37: #{two_layer_lstm_forward.3} parent=0 // pred_fallthru
    _

// kernel: two_layer_lstm_forward.2
$region0: #{two_layer_lstm_forward.2}
  #allocation0 [shape = 'u32[]', space=smem, size = 0x4, offset = 0x4, fixed_abs, tag = 'smem constant byte address 0x4 - core index']
  #allocation1 [shape = 'u32[72,128]{1,0:T(1,128)}', space=vmem, size = 0x9000, scoped, tag = 'internal scratch']
  #allocation2 [shape = 'f32[8,16,256]{2,1,0:T(8,128)}', space=vmem, size = 0x20000, scoped, tag = 'scratch operand']
  %s0 = inlined_call_operand.vmem [shape: bf16[8,16,8], index: 0, kind: input, shape index: {}]
  %s1 = inlined_call_operand.vmem [shape: bf16[8,256], index: 1, kind: input, shape index: {}]
  %s2 = inlined_call_operand.vmem [shape: bf16[64,256], index: 2, kind: input, shape index: {}]
  %s3 = inlined_call_operand.vmem [shape: f32[1,256], index: 3, kind: input, shape index: {}]
  %s4 = inlined_call_operand.vmem [shape: f32[16,64], index: 4, kind: output, shape index: {}]
  %s5 = sld [smem:[#allocation0]]
  $region26: #{two_layer_lstm_forward.2} parent=0
    _
  %s7 = ssub.s32 1, %s5
  %s8 = scalar_select 0, %s7, %s5
  // Predicated region
  $region2: #{two_layer_lstm_forward.2} parent=0 // pred_check
    _
  $region3: #{two_layer_lstm_forward.2} parent=0 // pred_check_branch
    %10 = sbr.rel (0) target = $region5
  $region4: #{two_layer_lstm_forward.2} parent=0 // pred_region
    _
  $region5: #{two_layer_lstm_forward.2} parent=0 // pred_fallthru
    _
  // Predicated region
  $region6: #{two_layer_lstm_forward.2} parent=0 // pred_check
    _
  $region7: #{two_layer_lstm_forward.2} parent=0 // pred_check_branch
    %12 = sbr.rel (0) target = $region9
  $region8: #{two_layer_lstm_forward.2} parent=0 // pred_region
    _
  $region9: #{two_layer_lstm_forward.2} parent=0 // pred_fallthru
    _
  // Predicated region
  $region10: #{two_layer_lstm_forward.2} parent=0 // pred_check
    _
  $region11: #{two_layer_lstm_forward.2} parent=0 // pred_check_branch
    %14 = sbr.rel (0) target = $region13
  $region12: #{two_layer_lstm_forward.2} parent=0 // pred_region
    _
  $region13: #{two_layer_lstm_forward.2} parent=0 // pred_fallthru
    _
  // Predicated region
  $region14: #{two_layer_lstm_forward.2} parent=0 // pred_check
    _
  $region15: #{two_layer_lstm_forward.2} parent=0 // pred_check_branch
    %16 = sbr.rel (0) target = $region17
  $region16: #{two_layer_lstm_forward.2} parent=0 // pred_region
    _
  $region17: #{two_layer_lstm_forward.2} parent=0 // pred_fallthru
    _
  %v18 = vld [vmem:[%s1] sm:$0xff]
  %v19 = vld [vmem:[%s2] sm:$0xff]
  %v20 = vld [vmem:[%s2 + $0x8] sm:$0xff]
  %v21 = vld [vmem:[%s2 + $0x10] sm:$0xff]
  %v22 = vld [vmem:[%s2 + $0x18] sm:$0xff]
  %v23 = vld [vmem:[%s2 + $0x20] sm:$0xff]
  %v24 = vld [vmem:[%s2 + $0x28] sm:$0xff]
  %v25 = vld [vmem:[%s2 + $0x30] sm:$0xff]
  %v26 = vld [vmem:[%s2 + $0x38] sm:$0xff]
  %v27 = vld [vmem:[%s3] sm:$0x3]
  %v28 = vld [vmem:[%s0] sm:$0xf]
  %v29 = vld [vmem:[%s0 + $0x4] sm:$0xf]
  %v30 = vld [vmem:[%s0 + $0x8] sm:$0xf]
  %v31 = vld [vmem:[%s0 + $0xc] sm:$0xf]
  %v32 = vld [vmem:[%s0 + $0x10] sm:$0xf]
  %v33 = vld [vmem:[%s0 + $0x14] sm:$0xf]
  %v34 = vld [vmem:[%s0 + $0x18] sm:$0xf]
  %v35 = vld [vmem:[%s0 + $0x1c] sm:$0xf]
  %v36 = vld [vmem:[%s0 + $0x20] sm:$0xf]
  %v37 = vld [vmem:[%s0 + $0x24] sm:$0xf]
  %v38 = vld [vmem:[%s0 + $0x28] sm:$0xf]
  %v39 = vld [vmem:[%s0 + $0x2c] sm:$0xf]
  %v40 = vld [vmem:[%s0 + $0x30] sm:$0xf]
  %v41 = vld [vmem:[%s0 + $0x34] sm:$0xf]
  %v42 = vld [vmem:[%s0 + $0x38] sm:$0xf]
  %v43 = vld [vmem:[%s0 + $0x3c] sm:$0xf]
  %v60 = vunpack.c.l.b16 %v28
  %v61 = vunpack.c.l.b16 %v29
  %v62 = vunpack.c.l.b16 %v30
  %v63 = vunpack.c.l.b16 %v31
  %v64 = vunpack.c.l.b16 %v32
  %v65 = vunpack.c.l.b16 %v33
  %v66 = vunpack.c.l.b16 %v34
  %v67 = vunpack.c.l.b16 %v35
  %v68 = vunpack.c.l.b16 %v36
  %v69 = vunpack.c.l.b16 %v37
  %v70 = vunpack.c.l.b16 %v38
  %v71 = vunpack.c.l.b16 %v39
  %v72 = vunpack.c.l.b16 %v40
  %v73 = vunpack.c.l.b16 %v41
  %v74 = vunpack.c.l.b16 %v42
  %v75 = vunpack.c.l.b16 %v43
  %v76 = vpack.c.b16 %v61, %v60
  %v77 = vpack.c.b16 %v63, %v62
  %v78 = vpack.c.b16 %v65, %v64
  %v79 = vpack.c.b16 %v67, %v66
  %v80 = vpack.c.b16 %v69, %v68
  %v81 = vpack.c.b16 %v71, %v70
  %v82 = vpack.c.b16 %v73, %v72
  %v83 = vpack.c.b16 %v75, %v74
  %v85 = vunpack.c.l.b16 %v18
  %v86 = vunpack.c.h.b16 %v18
  %v87 = vpack.c.b16 %v85, %v85
  %v88 = vpack.c.b16 %v86, %v86
  %vm89 = vcmask 64512
  %v91 = vsel %vm89, %v76, 0
  %v94 = vsel %vm89, %v77, 0
  %v97 = vsel %vm89, %v78, 0
  %v100 = vsel %vm89, %v79, 0
  %v103 = vsel %vm89, %v80, 0
  %v106 = vsel %vm89, %v81, 0
  %v109 = vsel %vm89, %v82, 0
  %v112 = vsel %vm89, %v83, 0
  %vm114 = vcmask 1043456
  %v116 = vsel %vm114, %v87, 0
  %v119 = vsel %vm114, %v88, 0
  %121 = vmatpush.bf16.msra.mxu0 0
  %122 = vmatpush.bf16.msra.mxu0 0
  %123 = vmatpush.bf16.msra.mxu0 0
  %124 = vmatpush.bf16.msra.mxu0 0
  %125 = vmatpush.bf16.msra.mxu0 0
  %126 = vmatpush.bf16.msra.mxu0 0
  %127 = vmatpush.bf16.msra.mxu0 0
  %128 = vmatpush.bf16.msra.mxu0 %v116
  %129 = vmatmul.bf16.gmra.mxu0 %v91
  %v130 = vpop.f32.mrf.mxu0
  %v131 = vadd.f32 0.0, %v130
  %v132 = vpop.f32.mrf.mxu0
  %v133 = vadd.f32 0.0, %v132
  %134 = vmatmul.bf16.gmra.mxu0 %v94
  %v135 = vpop.f32.mrf.mxu0
  %v136 = vadd.f32 0.0, %v135
  %v137 = vpop.f32.mrf.mxu0
  %v138 = vadd.f32 0.0, %v137
  %139 = vmatmul.bf16.gmra.mxu0 %v97
  %v140 = vpop.f32.mrf.mxu0
  %v141 = vadd.f32 0.0, %v140
  %v142 = vpop.f32.mrf.mxu0
  %v143 = vadd.f32 0.0, %v142
  %144 = vmatmul.bf16.gmra.mxu0 %v100
  %v145 = vpop.f32.mrf.mxu0
  %v146 = vadd.f32 0.0, %v145
  %v147 = vpop.f32.mrf.mxu0
  %v148 = vadd.f32 0.0, %v147
  %149 = vmatmul.bf16.gmra.mxu0 %v103
  %v150 = vpop.f32.mrf.mxu0
  %v151 = vadd.f32 0.0, %v150
  %v152 = vpop.f32.mrf.mxu0
  %v153 = vadd.f32 0.0, %v152
  %154 = vmatmul.bf16.gmra.mxu0 %v106
  %v155 = vpop.f32.mrf.mxu0
  %v156 = vadd.f32 0.0, %v155
  %v157 = vpop.f32.mrf.mxu0
  %v158 = vadd.f32 0.0, %v157
  %159 = vmatmul.bf16.gmra.mxu0 %v109
  %v160 = vpop.f32.mrf.mxu0
  %v161 = vadd.f32 0.0, %v160
  %v162 = vpop.f32.mrf.mxu0
  %v163 = vadd.f32 0.0, %v162
  %164 = vmatmul.bf16.gmra.mxu0 %v112
  %v165 = vpop.f32.mrf.mxu0
  %v166 = vadd.f32 0.0, %v165
  %v167 = vpop.f32.mrf.mxu0
  %v168 = vadd.f32 0.0, %v167
  %169 = vdwg.mxu0
  %170 = vmatpush.bf16.msra.mxu0 0
  %171 = vmatpush.bf16.msra.mxu0 0
  %172 = vmatpush.bf16.msra.mxu0 0
  %173 = vmatpush.bf16.msra.mxu0 0
  %174 = vmatpush.bf16.msra.mxu0 0
  %175 = vmatpush.bf16.msra.mxu0 0
  %176 = vmatpush.bf16.msra.mxu0 0
  %177 = vmatpush.bf16.msra.mxu0 %v119
  %178 = vmatmul.bf16.gmra.mxu0 %v91
  %v179 = vpop.f32.mrf.mxu0
  %v180 = vadd.f32 0.0, %v179
  %v181 = vpop.f32.mrf.mxu0
  %v182 = vadd.f32 0.0, %v181
  %183 = vmatmul.bf16.gmra.mxu0 %v94
  %v184 = vpop.f32.mrf.mxu0
  %v185 = vadd.f32 0.0, %v184
  %v186 = vpop.f32.mrf.mxu0
  %v187 = vadd.f32 0.0, %v186
  %188 = vmatmul.bf16.gmra.mxu0 %v97
  %v189 = vpop.f32.mrf.mxu0
  %v190 = vadd.f32 0.0, %v189
  %v191 = vpop.f32.mrf.mxu0
  %v192 = vadd.f32 0.0, %v191
  %193 = vmatmul.bf16.gmra.mxu0 %v100
  %v194 = vpop.f32.mrf.mxu0
  %v195 = vadd.f32 0.0, %v194
  %v196 = vpop.f32.mrf.mxu0
  %v197 = vadd.f32 0.0, %v196
  %198 = vmatmul.bf16.gmra.mxu0 %v103
  %v199 = vpop.f32.mrf.mxu0
  %v200 = vadd.f32 0.0, %v199
  %v201 = vpop.f32.mrf.mxu0
  %v202 = vadd.f32 0.0, %v201
  %203 = vmatmul.bf16.gmra.mxu0 %v106
  %v204 = vpop.f32.mrf.mxu0
  %v205 = vadd.f32 0.0, %v204
  %v206 = vpop.f32.mrf.mxu0
  %v207 = vadd.f32 0.0, %v206
  %208 = vmatmul.bf16.gmra.mxu0 %v109
  %v209 = vpop.f32.mrf.mxu0
  %v210 = vadd.f32 0.0, %v209
  %v211 = vpop.f32.mrf.mxu0
  %v212 = vadd.f32 0.0, %v211
  %213 = vmatmul.bf16.gmra.mxu0 %v112
  %v214 = vpop.f32.mrf.mxu0
  %v215 = vadd.f32 0.0, %v214
  %v216 = vpop.f32.mrf.mxu0
  %v217 = vadd.f32 0.0, %v216
  %218 = vdwg.mxu0
  %v220 = vperm.slane %v27, 0
  %v221 = vperm.slane %v27, 1
  %v224 = vadd.f32 %v131, %v220
  %v225 = vadd.f32 %v180, %v221
  %v226 = vadd.f32 %v133, %v220
  %v227 = vadd.f32 %v182, %v221
  %v228 = vadd.f32 %v136, %v220
  %v229 = vadd.f32 %v185, %v221
  %v230 = vadd.f32 %v138, %v220
  %v231 = vadd.f32 %v187, %v221
  %v232 = vadd.f32 %v141, %v220
  %v233 = vadd.f32 %v190, %v221
  %v234 = vadd.f32 %v143, %v220
  %v235 = vadd.f32 %v192, %v221
  %v236 = vadd.f32 %v146, %v220
  %v237 = vadd.f32 %v195, %v221
  %v238 = vadd.f32 %v148, %v220
  %v239 = vadd.f32 %v197, %v221
  %v240 = vadd.f32 %v151, %v220
  %v241 = vadd.f32 %v200, %v221
  %v242 = vadd.f32 %v153, %v220
  %v243 = vadd.f32 %v202, %v221
  %v244 = vadd.f32 %v156, %v220
  %v245 = vadd.f32 %v205, %v221
  %v246 = vadd.f32 %v158, %v220
  %v247 = vadd.f32 %v207, %v221
  %v248 = vadd.f32 %v161, %v220
  %v249 = vadd.f32 %v210, %v221
  %v250 = vadd.f32 %v163, %v220
  %v251 = vadd.f32 %v212, %v221
  %v252 = vadd.f32 %v166, %v220
  %v253 = vadd.f32 %v215, %v221
  %v254 = vadd.f32 %v168, %v220
  %v255 = vadd.f32 %v217, %v221
  %256 = vst [vmem:[#allocation2] sm:$0xff] %v224
  %257 = vst [vmem:[#allocation2 + $0x8] sm:$0xff] %v225
  %258 = vst [vmem:[#allocation2 + $0x10] sm:$0xff] %v226
  %259 = vst [vmem:[#allocation2 + $0x18] sm:$0xff] %v227
  %260 = vst [vmem:[#allocation2 + $0x20] sm:$0xff] %v228
  %261 = vst [vmem:[#allocation2 + $0x28] sm:$0xff] %v229
  %262 = vst [vmem:[#allocation2 + $0x30] sm:$0xff] %v230
  %263 = vst [vmem:[#allocation2 + $0x38] sm:$0xff] %v231
  %264 = vst [vmem:[#allocation2 + $0x40] sm:$0xff] %v232
  %265 = vst [vmem:[#allocation2 + $0x48] sm:$0xff] %v233
  %266 = vst [vmem:[#allocation2 + $0x50] sm:$0xff] %v234
  %267 = vst [vmem:[#allocation2 + $0x58] sm:$0xff] %v235
  %268 = vst [vmem:[#allocation2 + $0x60] sm:$0xff] %v236
  %269 = vst [vmem:[#allocation2 + $0x68] sm:$0xff] %v237
  %270 = vst [vmem:[#allocation2 + $0x70] sm:$0xff] %v238
  %271 = vst [vmem:[#allocation2 + $0x78] sm:$0xff] %v239
  %272 = vst [vmem:[#allocation2 + $0x80] sm:$0xff] %v240
  %273 = vst [vmem:[#allocation2 + $0x88] sm:$0xff] %v241
  %274 = vst [vmem:[#allocation2 + $0x90] sm:$0xff] %v242
  %275 = vst [vmem:[#allocation2 + $0x98] sm:$0xff] %v243
  %276 = vst [vmem:[#allocation2 + $0xa0] sm:$0xff] %v244
  %277 = vst [vmem:[#allocation2 + $0xa8] sm:$0xff] %v245
  %278 = vst [vmem:[#allocation2 + $0xb0] sm:$0xff] %v246
  %279 = vst [vmem:[#allocation2 + $0xb8] sm:$0xff] %v247
  %280 = vst [vmem:[#allocation2 + $0xc0] sm:$0xff] %v248
  %281 = vst [vmem:[#allocation2 + $0xc8] sm:$0xff] %v249
  %282 = vst [vmem:[#allocation2 + $0xd0] sm:$0xff] %v250
  %283 = vst [vmem:[#allocation2 + $0xd8] sm:$0xff] %v251
  %284 = vst [vmem:[#allocation2 + $0xe0] sm:$0xff] %v252
  %285 = vst [vmem:[#allocation2 + $0xe8] sm:$0xff] %v253
  %286 = vst [vmem:[#allocation2 + $0xf0] sm:$0xff] %v254
  %287 = vst [vmem:[#allocation2 + $0xf8] sm:$0xff] %v255
  %v288 = vld [vmem:[#allocation2] sm:$0xff]
  %v289 = vld [vmem:[#allocation2 + $0x8] sm:$0xff]
  %v290 = vld [vmem:[#allocation2 + $0x10] sm:$0xff]
  %v291 = vld [vmem:[#allocation2 + $0x18] sm:$0xff]
  %v300 = vunpack.c.l.b16 %v19
  %v301 = vunpack.c.h.b16 %v19
  %v302 = vunpack.c.l.b16 %v20
  %v303 = vunpack.c.h.b16 %v20
  %v304 = vunpack.c.l.b16 %v21
  %v305 = vunpack.c.h.b16 %v21
  %v306 = vunpack.c.l.b16 %v22
  %v307 = vunpack.c.h.b16 %v22
  %v308 = vunpack.c.l.b16 %v23
  %v309 = vunpack.c.h.b16 %v23
  %v310 = vunpack.c.l.b16 %v24
  %v311 = vunpack.c.h.b16 %v24
  %v312 = vunpack.c.l.b16 %v25
  %v313 = vunpack.c.h.b16 %v25
  %v314 = vunpack.c.l.b16 %v26
  %v315 = vunpack.c.h.b16 %v26
  %v316 = vpack.c.b16 %v302, %v300
  %v317 = vpack.c.b16 %v303, %v301
  %v318 = vpack.c.b16 %v306, %v304
  %v319 = vpack.c.b16 %v307, %v305
  %v320 = vpack.c.b16 %v310, %v308
  %v321 = vpack.c.b16 %v311, %v309
  %v322 = vpack.c.b16 %v314, %v312
  %v323 = vpack.c.b16 %v315, %v313
  %vm332 = vcmask 523264
  %v334 = vsel %vm332, 0, 0
  %336 = vmatpush.bf16.msra.mxu0 0
  %337 = vmatpush.bf16.msra.mxu0 0
  %338 = vmatpush.bf16.msra.mxu0 0
  %339 = vmatpush.bf16.msra.mxu0 0
  %340 = vmatpush.bf16.msra.mxu0 %v322
  %341 = vmatpush.bf16.msra.mxu0 %v320
  %342 = vmatpush.bf16.msra.mxu0 %v318
  %343 = vmatpush.bf16.msra.mxu0 %v316
  %344 = vmatmul.bf16.gmra.mxu0 %v334
  %v345 = vpop.f32.mrf.mxu0
  %v346 = vadd.f32 0.0, %v345
  %v347 = vpop.f32.mrf.mxu0
  %v348 = vadd.f32 0.0, %v347
  %349 = vdwg.mxu0
  %350 = vmatpush.bf16.msra.mxu0 0
  %351 = vmatpush.bf16.msra.mxu0 0
  %352 = vmatpush.bf16.msra.mxu0 0
  %353 = vmatpush.bf16.msra.mxu0 0
  %354 = vmatpush.bf16.msra.mxu0 %v323
  %355 = vmatpush.bf16.msra.mxu0 %v321
  %356 = vmatpush.bf16.msra.mxu0 %v319
  %357 = vmatpush.bf16.msra.mxu0 %v317
  %358 = vmatmul.bf16.gmra.mxu0 %v334
  %v359 = vpop.f32.mrf.mxu0
  %v360 = vadd.f32 0.0, %v359
  %v361 = vpop.f32.mrf.mxu0
  %v362 = vadd.f32 0.0, %v361
  %363 = vdwg.mxu0
  %v364 = vadd.f32 %v288, %v346
  %v365 = vadd.f32 %v289, %v360
  %v366 = vadd.f32 %v290, %v348
  %v367 = vadd.f32 %v291, %v362
  %v368 = vxor.u32 %v364, 2147483648
  %v369 = vxor.u32 %v366, 2147483648
  %v370 = vmul.f32 %v368, 1.442695
  %v371 = vpow.pop %v370
  %v372 = vmul.f32 %v369, 1.442695
  %v373 = vpow.pop %v372
  %v374 = vadd.f32 %v371, 1.0
  %v375 = vadd.f32 %v373, 1.0
  %v376 = vrcp.pop %v374
  %v377 = vmul.f32 %v374, %v376
  %v378 = vsub.f32 1.0, %v377
  %v379 = vmul.f32 %v376, %v378
  %v380 = vadd.f32 %v376, %v379
  %vm381 = vweird.f32 %v374
  %vm382 = vweird.f32 %v376
  %vm383 = vmor %vm381, %vm382
  %v384 = vsel %vm383, %v376, %v380
  %v385 = vand.u32 2147483647, %v374
  %vm386 = vcmp.eq.f32.partialorder %v385, 8.507059e+37
  %v387 = vand.u32 %v374, 2147483648
  %v388 = vor.u32 1.1754944e-38, %v387
  %v389 = vsel %vm386, %v388, %v384
  %v390 = vmul.f32 1.0, %v389
  %v391 = vrcp.pop %v375
  %v392 = vmul.f32 %v375, %v391
  %v393 = vsub.f32 1.0, %v392
  %v394 = vmul.f32 %v391, %v393
  %v395 = vadd.f32 %v391, %v394
  %vm396 = vweird.f32 %v375
  %vm397 = vweird.f32 %v391
  %vm398 = vmor %vm396, %vm397
  %v399 = vsel %vm398, %v391, %v395
  %v400 = vand.u32 2147483647, %v375
  %vm401 = vcmp.eq.f32.partialorder %v400, 8.507059e+37
  %v402 = vand.u32 %v375, 2147483648
  %v403 = vor.u32 1.1754944e-38, %v402
  %v404 = vsel %vm401, %v403, %v399
  %v405 = vmul.f32 1.0, %v404
  %v406 = vtanh.pop %v365
  %v407 = vtanh.pop %v367
  %v408 = vxor.u32 %v365, 2147483648
  %v409 = vxor.u32 %v367, 2147483648
  %v410 = vmul.f32 %v408, 1.442695
  %v411 = vpow.pop %v410
  %v412 = vmul.f32 %v409, 1.442695
  %v413 = vpow.pop %v412
  %v414 = vadd.f32 %v411, 1.0
  %v415 = vadd.f32 %v413, 1.0
  %v416 = vrcp.pop %v414
  %v417 = vmul.f32 %v414, %v416
  %v418 = vsub.f32 1.0, %v417
  %v419 = vmul.f32 %v416, %v418
  %v420 = vadd.f32 %v416, %v419
  %vm421 = vweird.f32 %v414
  %vm422 = vweird.f32 %v416
  %vm423 = vmor %vm421, %vm422
  %v424 = vsel %vm423, %v416, %v420
  %v425 = vand.u32 2147483647, %v414
  %vm426 = vcmp.eq.f32.partialorder %v425, 8.507059e+37
  %v427 = vand.u32 %v414, 2147483648
  %v428 = vor.u32 1.1754944e-38, %v427
  %v429 = vsel %vm426, %v428, %v424
  %v430 = vmul.f32 1.0, %v429
  %v431 = vrcp.pop %v415
  %v432 = vmul.f32 %v415, %v431
  %v433 = vsub.f32 1.0, %v432
  %v434 = vmul.f32 %v431, %v433
  %v435 = vadd.f32 %v431, %v434
  %vm436 = vweird.f32 %v415
  %vm437 = vweird.f32 %v431
  %vm438 = vmor %vm436, %vm437
  %v439 = vsel %vm438, %v431, %v435
  %v440 = vand.u32 2147483647, %v415
  %vm441 = vcmp.eq.f32.partialorder %v440, 8.507059e+37
  %v442 = vand.u32 %v415, 2147483648
  %v443 = vor.u32 1.1754944e-38, %v442
  %v444 = vsel %vm441, %v443, %v439
  %v445 = vmul.f32 1.0, %v444
  %v446 = vmul.f32 %v390, 0.0
  %v447 = vmul.f32 %v405, 0.0
  %v448 = vmul.f32 %v390, %v406
  %v449 = vmul.f32 %v405, %v407
  %452 = vrot.lane.b32.xlu0 %v448, 64
  %v453 = vpop.permute.xlu0 %452
  %454 = vrot.lane.b32.xlu0 %v449, 64
  %v455 = vpop.permute.xlu0 %454
  %v458 = vadd.f32 %v446, %v453
  %v459 = vadd.f32 %v447, %v455
  %v460 = vtanh.pop %v458
  %v461 = vtanh.pop %v459
  %v462 = vmul.f32 %v430, %v460
  %v463 = vmul.f32 %v445, %v461
  %s464 = scalar_lea.vmem [#allocation2], 32
  %v465 = vld [vmem:[%s464] sm:$0xff]
  %v466 = vld [vmem:[%s464 + $0x8] sm:$0xff]
  %v467 = vld [vmem:[%s464 + $0x10] sm:$0xff]
  %v468 = vld [vmem:[%s464 + $0x18] sm:$0xff]
  %v469 = vpack.c.bf16 %v463, %v462
  %471 = vrot.lane.b32.xlu0 %v469, 64
  %v472 = vpop.permute.xlu0 %471
  %v474 = vsel %vm332, %v472, 0
  %476 = vmatpush.bf16.msra.mxu0 0
  %477 = vmatpush.bf16.msra.mxu0 0
  %478 = vmatpush.bf16.msra.mxu0 0
  %479 = vmatpush.bf16.msra.mxu0 0
  %480 = vmatpush.bf16.msra.mxu0 %v322
  %481 = vmatpush.bf16.msra.mxu0 %v320
  %482 = vmatpush.bf16.msra.mxu0 %v318
  %483 = vmatpush.bf16.msra.mxu0 %v316
  %484 = vmatmul.bf16.gmra.mxu0 %v474
  %v485 = vpop.f32.mrf.mxu0
  %v486 = vadd.f32 0.0, %v485
  %v487 = vpop.f32.mrf.mxu0
  %v488 = vadd.f32 0.0, %v487
  %489 = vdwg.mxu0
  %490 = vmatpush.bf16.msra.mxu0 0
  %491 = vmatpush.bf16.msra.mxu0 0
  %492 = vmatpush.bf16.msra.mxu0 0
  %493 = vmatpush.bf16.msra.mxu0 0
  %494 = vmatpush.bf16.msra.mxu0 %v323
  %495 = vmatpush.bf16.msra.mxu0 %v321
  %496 = vmatpush.bf16.msra.mxu0 %v319
  %497 = vmatpush.bf16.msra.mxu0 %v317
  %498 = vmatmul.bf16.gmra.mxu0 %v474
  %v499 = vpop.f32.mrf.mxu0
  %v500 = vadd.f32 0.0, %v499
  %v501 = vpop.f32.mrf.mxu0
  %v502 = vadd.f32 0.0, %v501
  %503 = vdwg.mxu0
  %v504 = vadd.f32 %v465, %v486
  %v505 = vadd.f32 %v466, %v500
  %v506 = vadd.f32 %v467, %v488
  %v507 = vadd.f32 %v468, %v502
  %v508 = vxor.u32 %v504, 2147483648
  %v509 = vxor.u32 %v506, 2147483648
  %v510 = vmul.f32 %v508, 1.442695
  %v511 = vpow.pop %v510
  %v512 = vmul.f32 %v509, 1.442695
  %v513 = vpow.pop %v512
  %v514 = vadd.f32 %v511, 1.0
  %v515 = vadd.f32 %v513, 1.0
  %v516 = vrcp.pop %v514
  %v517 = vmul.f32 %v514, %v516
  %v518 = vsub.f32 1.0, %v517
  %v519 = vmul.f32 %v516, %v518
  %v520 = vadd.f32 %v516, %v519
  %vm521 = vweird.f32 %v514
  %vm522 = vweird.f32 %v516
  %vm523 = vmor %vm521, %vm522
  %v524 = vsel %vm523, %v516, %v520
  %v525 = vand.u32 2147483647, %v514
  %vm526 = vcmp.eq.f32.partialorder %v525, 8.507059e+37
  %v527 = vand.u32 %v514, 2147483648
  %v528 = vor.u32 1.1754944e-38, %v527
  %v529 = vsel %vm526, %v528, %v524
  %v530 = vmul.f32 1.0, %v529
  %v531 = vrcp.pop %v515
  %v532 = vmul.f32 %v515, %v531
  %v533 = vsub.f32 1.0, %v532
  %v534 = vmul.f32 %v531, %v533
  %v535 = vadd.f32 %v531, %v534
  %vm536 = vweird.f32 %v515
  %vm537 = vweird.f32 %v531
  %vm538 = vmor %vm536, %vm537
  %v539 = vsel %vm538, %v531, %v535
  %v540 = vand.u32 2147483647, %v515
  %vm541 = vcmp.eq.f32.partialorder %v540, 8.507059e+37
  %v542 = vand.u32 %v515, 2147483648
  %v543 = vor.u32 1.1754944e-38, %v542
  %v544 = vsel %vm541, %v543, %v539
  %v545 = vmul.f32 1.0, %v544
  %v546 = vtanh.pop %v505
  %v547 = vtanh.pop %v507
  %v548 = vxor.u32 %v505, 2147483648
  %v549 = vxor.u32 %v507, 2147483648
  %v550 = vmul.f32 %v548, 1.442695
  %v551 = vpow.pop %v550
  %v552 = vmul.f32 %v549, 1.442695
  %v553 = vpow.pop %v552
  %v554 = vadd.f32 %v551, 1.0
  %v555 = vadd.f32 %v553, 1.0
  %v556 = vrcp.pop %v554
  %v557 = vmul.f32 %v554, %v556
  %v558 = vsub.f32 1.0, %v557
  %v559 = vmul.f32 %v556, %v558
  %v560 = vadd.f32 %v556, %v559
  %vm561 = vweird.f32 %v554
  %vm562 = vweird.f32 %v556
  %vm563 = vmor %vm561, %vm562
  %v564 = vsel %vm563, %v556, %v560
  %v565 = vand.u32 2147483647, %v554
  %vm566 = vcmp.eq.f32.partialorder %v565, 8.507059e+37
  %v567 = vand.u32 %v554, 2147483648
  %v568 = vor.u32 1.1754944e-38, %v567
  %v569 = vsel %vm566, %v568, %v564
  %v570 = vmul.f32 1.0, %v569
  %v571 = vrcp.pop %v555
  %v572 = vmul.f32 %v555, %v571
  %v573 = vsub.f32 1.0, %v572
  %v574 = vmul.f32 %v571, %v573
  %v575 = vadd.f32 %v571, %v574
  %vm576 = vweird.f32 %v555
  %vm577 = vweird.f32 %v571
  %vm578 = vmor %vm576, %vm577
  %v579 = vsel %vm578, %v571, %v575
  %v580 = vand.u32 2147483647, %v555
  %vm581 = vcmp.eq.f32.partialorder %v580, 8.507059e+37
  %v582 = vand.u32 %v555, 2147483648
  %v583 = vor.u32 1.1754944e-38, %v582
  %v584 = vsel %vm581, %v583, %v579
  %v585 = vmul.f32 1.0, %v584
  %v586 = vmul.f32 %v530, %v458
  %v587 = vmul.f32 %v545, %v459
  %v588 = vmul.f32 %v530, %v546
  %v589 = vmul.f32 %v545, %v547
  %592 = vrot.lane.b32.xlu0 %v588, 64
  %v593 = vpop.permute.xlu0 %592
  %594 = vrot.lane.b32.xlu0 %v589, 64
  %v595 = vpop.permute.xlu0 %594
  %v598 = vadd.f32 %v586, %v593
  %v599 = vadd.f32 %v587, %v595
  %v600 = vtanh.pop %v598
  %v601 = vtanh.pop %v599
  %v602 = vmul.f32 %v570, %v600
  %v603 = vmul.f32 %v585, %v601
  %s604 = scalar_lea.vmem [#allocation2], 64
  %v605 = vld [vmem:[%s604] sm:$0xff]
  %v606 = vld [vmem:[%s604 + $0x8] sm:$0xff]
  %v607 = vld [vmem:[%s604 + $0x10] sm:$0xff]
  %v608 = vld [vmem:[%s604 + $0x18] sm:$0xff]
  %v609 = vpack.c.bf16 %v603, %v602
  %611 = vrot.lane.b32.xlu0 %v609, 64
  %v612 = vpop.permute.xlu0 %611
  %v614 = vsel %vm332, %v612, 0
  %616 = vmatpush.bf16.msra.mxu0 0
  %617 = vmatpush.bf16.msra.mxu0 0
  %618 = vmatpush.bf16.msra.mxu0 0
  %619 = vmatpush.bf16.msra.mxu0 0
  %620 = vmatpush.bf16.msra.mxu0 %v322
  %621 = vmatpush.bf16.msra.mxu0 %v320
  %622 = vmatpush.bf16.msra.mxu0 %v318
  %623 = vmatpush.bf16.msra.mxu0 %v316
  %624 = vmatmul.bf16.gmra.mxu0 %v614
  %v625 = vpop.f32.mrf.mxu0
  %v626 = vadd.f32 0.0, %v625
  %v627 = vpop.f32.mrf.mxu0
  %v628 = vadd.f32 0.0, %v627
  %629 = vdwg.mxu0
  %630 = vmatpush.bf16.msra.mxu0 0
  %631 = vmatpush.bf16.msra.mxu0 0
  %632 = vmatpush.bf16.msra.mxu0 0
  %633 = vmatpush.bf16.msra.mxu0 0
  %634 = vmatpush.bf16.msra.mxu0 %v323
  %635 = vmatpush.bf16.msra.mxu0 %v321
  %636 = vmatpush.bf16.msra.mxu0 %v319
  %637 = vmatpush.bf16.msra.mxu0 %v317
  %638 = vmatmul.bf16.gmra.mxu0 %v614
  %v639 = vpop.f32.mrf.mxu0
  %v640 = vadd.f32 0.0, %v639
  %v641 = vpop.f32.mrf.mxu0
  %v642 = vadd.f32 0.0, %v641
  %643 = vdwg.mxu0
  %v644 = vadd.f32 %v605, %v626
  %v645 = vadd.f32 %v606, %v640
  %v646 = vadd.f32 %v607, %v628
  %v647 = vadd.f32 %v608, %v642
  %v648 = vxor.u32 %v644, 2147483648
  %v649 = vxor.u32 %v646, 2147483648
  %v650 = vmul.f32 %v648, 1.442695
  %v651 = vpow.pop %v650
  %v652 = vmul.f32 %v649, 1.442695
  %v653 = vpow.pop %v652
  %v654 = vadd.f32 %v651, 1.0
  %v655 = vadd.f32 %v653, 1.0
  %v656 = vrcp.pop %v654
  %v657 = vmul.f32 %v654, %v656
  %v658 = vsub.f32 1.0, %v657
  %v659 = vmul.f32 %v656, %v658
  %v660 = vadd.f32 %v656, %v659
  %vm661 = vweird.f32 %v654
  %vm662 = vweird.f32 %v656
  %vm663 = vmor %vm661, %vm662
  %v664 = vsel %vm663, %v656, %v660
  %v665 = vand.u32 2147483647, %v654
  %vm666 = vcmp.eq.f32.partialorder %v665, 8.507059e+37
  %v667 = vand.u32 %v654, 2147483648
  %v668 = vor.u32 1.1754944e-38, %v667
  %v669 = vsel %vm666, %v668, %v664
  %v670 = vmul.f32 1.0, %v669
  %v671 = vrcp.pop %v655
  %v672 = vmul.f32 %v655, %v671
  %v673 = vsub.f32 1.0, %v672
  %v674 = vmul.f32 %v671, %v673
  %v675 = vadd.f32 %v671, %v674
  %vm676 = vweird.f32 %v655
  %vm677 = vweird.f32 %v671
  %vm678 = vmor %vm676, %vm677
  %v679 = vsel %vm678, %v671, %v675
  %v680 = vand.u32 2147483647, %v655
  %vm681 = vcmp.eq.f32.partialorder %v680, 8.507059e+37
  %v682 = vand.u32 %v655, 2147483648
  %v683 = vor.u32 1.1754944e-38, %v682
  %v684 = vsel %vm681, %v683, %v679
  %v685 = vmul.f32 1.0, %v684
  %v686 = vtanh.pop %v645
  %v687 = vtanh.pop %v647
  %v688 = vxor.u32 %v645, 2147483648
  %v689 = vxor.u32 %v647, 2147483648
  %v690 = vmul.f32 %v688, 1.442695
  %v691 = vpow.pop %v690
  %v692 = vmul.f32 %v689, 1.442695
  %v693 = vpow.pop %v692
  %v694 = vadd.f32 %v691, 1.0
  %v695 = vadd.f32 %v693, 1.0
  %v696 = vrcp.pop %v694
  %v697 = vmul.f32 %v694, %v696
  %v698 = vsub.f32 1.0, %v697
  %v699 = vmul.f32 %v696, %v698
  %v700 = vadd.f32 %v696, %v699
  %vm701 = vweird.f32 %v694
  %vm702 = vweird.f32 %v696
  %vm703 = vmor %vm701, %vm702
  %v704 = vsel %vm703, %v696, %v700
  %v705 = vand.u32 2147483647, %v694
  %vm706 = vcmp.eq.f32.partialorder %v705, 8.507059e+37
  %v707 = vand.u32 %v694, 2147483648
  %v708 = vor.u32 1.1754944e-38, %v707
  %v709 = vsel %vm706, %v708, %v704
  %v710 = vmul.f32 1.0, %v709
  %v711 = vrcp.pop %v695
  %v712 = vmul.f32 %v695, %v711
  %v713 = vsub.f32 1.0, %v712
  %v714 = vmul.f32 %v711, %v713
  %v715 = vadd.f32 %v711, %v714
  %vm716 = vweird.f32 %v695
  %vm717 = vweird.f32 %v711
  %vm718 = vmor %vm716, %vm717
  %v719 = vsel %vm718, %v711, %v715
  %v720 = vand.u32 2147483647, %v695
  %vm721 = vcmp.eq.f32.partialorder %v720, 8.507059e+37
  %v722 = vand.u32 %v695, 2147483648
  %v723 = vor.u32 1.1754944e-38, %v722
  %v724 = vsel %vm721, %v723, %v719
  %v725 = vmul.f32 1.0, %v724
  %v726 = vmul.f32 %v670, %v598
  %v727 = vmul.f32 %v685, %v599
  %v728 = vmul.f32 %v670, %v686
  %v729 = vmul.f32 %v685, %v687
  %732 = vrot.lane.b32.xlu0 %v728, 64
  %v733 = vpop.permute.xlu0 %732
  %734 = vrot.lane.b32.xlu0 %v729, 64
  %v735 = vpop.permute.xlu0 %734
  %v738 = vadd.f32 %v726, %v733
  %v739 = vadd.f32 %v727, %v735
  %v740 = vtanh.pop %v738
  %v741 = vtanh.pop %v739
  %v742 = vmul.f32 %v710, %v740
  %v743 = vmul.f32 %v725, %v741
  %s744 = scalar_lea.vmem [#allocation2], 96
  %v745 = vld [vmem:[%s744] sm:$0xff]
  %v746 = vld [vmem:[%s744 + $0x8] sm:$0xff]
  %v747 = vld [vmem:[%s744 + $0x10] sm:$0xff]
  %v748 = vld [vmem:[%s744 + $0x18] sm:$0xff]
  %v749 = vpack.c.bf16 %v743, %v742
  %751 = vrot.lane.b32.xlu0 %v749, 64
  %v752 = vpop.permute.xlu0 %751
  %v754 = vsel %vm332, %v752, 0
  %756 = vmatpush.bf16.msra.mxu0 0
  %757 = vmatpush.bf16.msra.mxu0 0
  %758 = vmatpush.bf16.msra.mxu0 0
  %759 = vmatpush.bf16.msra.mxu0 0
  %760 = vmatpush.bf16.msra.mxu0 %v322
  %761 = vmatpush.bf16.msra.mxu0 %v320
  %762 = vmatpush.bf16.msra.mxu0 %v318
  %763 = vmatpush.bf16.msra.mxu0 %v316
  %764 = vmatmul.bf16.gmra.mxu0 %v754
  %v765 = vpop.f32.mrf.mxu0
  %v766 = vadd.f32 0.0, %v765
  %v767 = vpop.f32.mrf.mxu0
  %v768 = vadd.f32 0.0, %v767
  %769 = vdwg.mxu0
  %770 = vmatpush.bf16.msra.mxu0 0
  %771 = vmatpush.bf16.msra.mxu0 0
  %772 = vmatpush.bf16.msra.mxu0 0
  %773 = vmatpush.bf16.msra.mxu0 0
  %774 = vmatpush.bf16.msra.mxu0 %v323
  %775 = vmatpush.bf16.msra.mxu0 %v321
  %776 = vmatpush.bf16.msra.mxu0 %v319
  %777 = vmatpush.bf16.msra.mxu0 %v317
  %778 = vmatmul.bf16.gmra.mxu0 %v754
  %v779 = vpop.f32.mrf.mxu0
  %v780 = vadd.f32 0.0, %v779
  %v781 = vpop.f32.mrf.mxu0
  %v782 = vadd.f32 0.0, %v781
  %783 = vdwg.mxu0
  %v784 = vadd.f32 %v745, %v766
  %v785 = vadd.f32 %v746, %v780
  %v786 = vadd.f32 %v747, %v768
  %v787 = vadd.f32 %v748, %v782
  %v788 = vxor.u32 %v784, 2147483648
  %v789 = vxor.u32 %v786, 2147483648
  %v790 = vmul.f32 %v788, 1.442695
  %v791 = vpow.pop %v790
  %v792 = vmul.f32 %v789, 1.442695
  %v793 = vpow.pop %v792
  %v794 = vadd.f32 %v791, 1.0
  %v795 = vadd.f32 %v793, 1.0
  %v796 = vrcp.pop %v794
  %v797 = vmul.f32 %v794, %v796
  %v798 = vsub.f32 1.0, %v797
  %v799 = vmul.f32 %v796, %v798
  %v800 = vadd.f32 %v796, %v799
  %vm801 = vweird.f32 %v794
  %vm802 = vweird.f32 %v796
  %vm803 = vmor %vm801, %vm802
  %v804 = vsel %vm803, %v796, %v800
  %v805 = vand.u32 2147483647, %v794
  %vm806 = vcmp.eq.f32.partialorder %v805, 8.507059e+37
  %v807 = vand.u32 %v794, 2147483648
  %v808 = vor.u32 1.1754944e-38, %v807
  %v809 = vsel %vm806, %v808, %v804
  %v810 = vmul.f32 1.0, %v809
  %v811 = vrcp.pop %v795
  %v812 = vmul.f32 %v795, %v811
  %v813 = vsub.f32 1.0, %v812
  %v814 = vmul.f32 %v811, %v813
  %v815 = vadd.f32 %v811, %v814
  %vm816 = vweird.f32 %v795
  %vm817 = vweird.f32 %v811
  %vm818 = vmor %vm816, %vm817
  %v819 = vsel %vm818, %v811, %v815
  %v820 = vand.u32 2147483647, %v795
  %vm821 = vcmp.eq.f32.partialorder %v820, 8.507059e+37
  %v822 = vand.u32 %v795, 2147483648
  %v823 = vor.u32 1.1754944e-38, %v822
  %v824 = vsel %vm821, %v823, %v819
  %v825 = vmul.f32 1.0, %v824
  %v826 = vtanh.pop %v785
  %v827 = vtanh.pop %v787
  %v828 = vxor.u32 %v785, 2147483648
  %v829 = vxor.u32 %v787, 2147483648
  %v830 = vmul.f32 %v828, 1.442695
  %v831 = vpow.pop %v830
  %v832 = vmul.f32 %v829, 1.442695
  %v833 = vpow.pop %v832
  %v834 = vadd.f32 %v831, 1.0
  %v835 = vadd.f32 %v833, 1.0
  %v836 = vrcp.pop %v834
  %v837 = vmul.f32 %v834, %v836
  %v838 = vsub.f32 1.0, %v837
  %v839 = vmul.f32 %v836, %v838
  %v840 = vadd.f32 %v836, %v839
  %vm841 = vweird.f32 %v834
  %vm842 = vweird.f32 %v836
  %vm843 = vmor %vm841, %vm842
  %v844 = vsel %vm843, %v836, %v840
  %v845 = vand.u32 2147483647, %v834
  %vm846 = vcmp.eq.f32.partialorder %v845, 8.507059e+37
  %v847 = vand.u32 %v834, 2147483648
  %v848 = vor.u32 1.1754944e-38, %v847
  %v849 = vsel %vm846, %v848, %v844
  %v850 = vmul.f32 1.0, %v849
  %v851 = vrcp.pop %v835
  %v852 = vmul.f32 %v835, %v851
  %v853 = vsub.f32 1.0, %v852
  %v854 = vmul.f32 %v851, %v853
  %v855 = vadd.f32 %v851, %v854
  %vm856 = vweird.f32 %v835
  %vm857 = vweird.f32 %v851
  %vm858 = vmor %vm856, %vm857
  %v859 = vsel %vm858, %v851, %v855
  %v860 = vand.u32 2147483647, %v835
  %vm861 = vcmp.eq.f32.partialorder %v860, 8.507059e+37
  %v862 = vand.u32 %v835, 2147483648
  %v863 = vor.u32 1.1754944e-38, %v862
  %v864 = vsel %vm861, %v863, %v859
  %v865 = vmul.f32 1.0, %v864
  %v866 = vmul.f32 %v810, %v738
  %v867 = vmul.f32 %v825, %v739
  %v868 = vmul.f32 %v810, %v826
  %v869 = vmul.f32 %v825, %v827
  %872 = vrot.lane.b32.xlu0 %v868, 64
  %v873 = vpop.permute.xlu0 %872
  %874 = vrot.lane.b32.xlu0 %v869, 64
  %v875 = vpop.permute.xlu0 %874
  %v878 = vadd.f32 %v866, %v873
  %v879 = vadd.f32 %v867, %v875
  %v880 = vtanh.pop %v878
  %v881 = vtanh.pop %v879
  %v882 = vmul.f32 %v850, %v880
  %v883 = vmul.f32 %v865, %v881
  %s884 = scalar_lea.vmem [#allocation2], 128
  %v885 = vld [vmem:[%s884] sm:$0xff]
  %v886 = vld [vmem:[%s884 + $0x8] sm:$0xff]
  %v887 = vld [vmem:[%s884 + $0x10] sm:$0xff]
  %v888 = vld [vmem:[%s884 + $0x18] sm:$0xff]
  %v889 = vpack.c.bf16 %v883, %v882
  %891 = vrot.lane.b32.xlu0 %v889, 64
  %v892 = vpop.permute.xlu0 %891
  %v894 = vsel %vm332, %v892, 0
  %896 = vmatpush.bf16.msra.mxu0 0
  %897 = vmatpush.bf16.msra.mxu0 0
  %898 = vmatpush.bf16.msra.mxu0 0
  %899 = vmatpush.bf16.msra.mxu0 0
  %900 = vmatpush.bf16.msra.mxu0 %v322
  %901 = vmatpush.bf16.msra.mxu0 %v320
  %902 = vmatpush.bf16.msra.mxu0 %v318
  %903 = vmatpush.bf16.msra.mxu0 %v316
  %904 = vmatmul.bf16.gmra.mxu0 %v894
  %v905 = vpop.f32.mrf.mxu0
  %v906 = vadd.f32 0.0, %v905
  %v907 = vpop.f32.mrf.mxu0
  %v908 = vadd.f32 0.0, %v907
  %909 = vdwg.mxu0
  %910 = vmatpush.bf16.msra.mxu0 0
  %911 = vmatpush.bf16.msra.mxu0 0
  %912 = vmatpush.bf16.msra.mxu0 0
  %913 = vmatpush.bf16.msra.mxu0 0
  %914 = vmatpush.bf16.msra.mxu0 %v323
  %915 = vmatpush.bf16.msra.mxu0 %v321
  %916 = vmatpush.bf16.msra.mxu0 %v319
  %917 = vmatpush.bf16.msra.mxu0 %v317
  %918 = vmatmul.bf16.gmra.mxu0 %v894
  %v919 = vpop.f32.mrf.mxu0
  %v920 = vadd.f32 0.0, %v919
  %v921 = vpop.f32.mrf.mxu0
  %v922 = vadd.f32 0.0, %v921
  %923 = vdwg.mxu0
  %v924 = vadd.f32 %v885, %v906
  %v925 = vadd.f32 %v886, %v920
  %v926 = vadd.f32 %v887, %v908
  %v927 = vadd.f32 %v888, %v922
  %v928 = vxor.u32 %v924, 2147483648
  %v929 = vxor.u32 %v926, 2147483648
  %v930 = vmul.f32 %v928, 1.442695
  %v931 = vpow.pop %v930
  %v932 = vmul.f32 %v929, 1.442695
  %v933 = vpow.pop %v932
  %v934 = vadd.f32 %v931, 1.0
  %v935 = vadd.f32 %v933, 1.0
  %v936 = vrcp.pop %v934
  %v937 = vmul.f32 %v934, %v936
  %v938 = vsub.f32 1.0, %v937
  %v939 = vmul.f32 %v936, %v938
  %v940 = vadd.f32 %v936, %v939
  %vm941 = vweird.f32 %v934
  %vm942 = vweird.f32 %v936
  %vm943 = vmor %vm941, %vm942
  %v944 = vsel %vm943, %v936, %v940
  %v945 = vand.u32 2147483647, %v934
  %vm946 = vcmp.eq.f32.partialorder %v945, 8.507059e+37
  %v947 = vand.u32 %v934, 2147483648
  %v948 = vor.u32 1.1754944e-38, %v947
  %v949 = vsel %vm946, %v948, %v944
  %v950 = vmul.f32 1.0, %v949
  %v951 = vrcp.pop %v935
  %v952 = vmul.f32 %v935, %v951
  %v953 = vsub.f32 1.0, %v952
  %v954 = vmul.f32 %v951, %v953
  %v955 = vadd.f32 %v951, %v954
  %vm956 = vweird.f32 %v935
  %vm957 = vweird.f32 %v951
  %vm958 = vmor %vm956, %vm957
  %v959 = vsel %vm958, %v951, %v955
  %v960 = vand.u32 2147483647, %v935
  %vm961 = vcmp.eq.f32.partialorder %v960, 8.507059e+37
  %v962 = vand.u32 %v935, 2147483648
  %v963 = vor.u32 1.1754944e-38, %v962
  %v964 = vsel %vm961, %v963, %v959
  %v965 = vmul.f32 1.0, %v964
  %v966 = vtanh.pop %v925
  %v967 = vtanh.pop %v927
  %v968 = vxor.u32 %v925, 2147483648
  %v969 = vxor.u32 %v927, 2147483648
  %v970 = vmul.f32 %v968, 1.442695
  %v971 = vpow.pop %v970
  %v972 = vmul.f32 %v969, 1.442695
  %v973 = vpow.pop %v972
  %v974 = vadd.f32 %v971, 1.0
  %v975 = vadd.f32 %v973, 1.0
  %v976 = vrcp.pop %v974
  %v977 = vmul.f32 %v974, %v976
  %v978 = vsub.f32 1.0, %v977
  %v979 = vmul.f32 %v976, %v978
  %v980 = vadd.f32 %v976, %v979
  %vm981 = vweird.f32 %v974
  %vm982 = vweird.f32 %v976
  %vm983 = vmor %vm981, %vm982
  %v984 = vsel %vm983, %v976, %v980
  %v985 = vand.u32 2147483647, %v974
  %vm986 = vcmp.eq.f32.partialorder %v985, 8.507059e+37
  %v987 = vand.u32 %v974, 2147483648
  %v988 = vor.u32 1.1754944e-38, %v987
  %v989 = vsel %vm986, %v988, %v984
  %v990 = vmul.f32 1.0, %v989
  %v991 = vrcp.pop %v975
  %v992 = vmul.f32 %v975, %v991
  %v993 = vsub.f32 1.0, %v992
  %v994 = vmul.f32 %v991, %v993
  %v995 = vadd.f32 %v991, %v994
  %vm996 = vweird.f32 %v975
  %vm997 = vweird.f32 %v991
  %vm998 = vmor %vm996, %vm997
  %v999 = vsel %vm998, %v991, %v995
  %v1000 = vand.u32 2147483647, %v975
  %vm1001 = vcmp.eq.f32.partialorder %v1000, 8.507059e+37
  %v1002 = vand.u32 %v975, 2147483648
  %v1003 = vor.u32 1.1754944e-38, %v1002
  %v1004 = vsel %vm1001, %v1003, %v999
  %v1005 = vmul.f32 1.0, %v1004
  %v1006 = vmul.f32 %v950, %v878
  %v1007 = vmul.f32 %v965, %v879
  %v1008 = vmul.f32 %v950, %v966
  %v1009 = vmul.f32 %v965, %v967
  %1012 = vrot.lane.b32.xlu0 %v1008, 64
  %v1013 = vpop.permute.xlu0 %1012
  %1014 = vrot.lane.b32.xlu0 %v1009, 64
  %v1015 = vpop.permute.xlu0 %1014
  %v1018 = vadd.f32 %v1006, %v1013
  %v1019 = vadd.f32 %v1007, %v1015
  %v1020 = vtanh.pop %v1018
  %v1021 = vtanh.pop %v1019
  %v1022 = vmul.f32 %v990, %v1020
  %v1023 = vmul.f32 %v1005, %v1021
  %s1024 = scalar_lea.vmem [#allocation2], 160
  %v1025 = vld [vmem:[%s1024] sm:$0xff]
  %v1026 = vld [vmem:[%s1024 + $0x8] sm:$0xff]
  %v1027 = vld [vmem:[%s1024 + $0x10] sm:$0xff]
  %v1028 = vld [vmem:[%s1024 + $0x18] sm:$0xff]
  %v1029 = vpack.c.bf16 %v1023, %v1022
  %1031 = vrot.lane.b32.xlu0 %v1029, 64
  %v1032 = vpop.permute.xlu0 %1031
  %v1034 = vsel %vm332, %v1032, 0
  %1036 = vmatpush.bf16.msra.mxu0 0
  %1037 = vmatpush.bf16.msra.mxu0 0
  %1038 = vmatpush.bf16.msra.mxu0 0
  %1039 = vmatpush.bf16.msra.mxu0 0
  %1040 = vmatpush.bf16.msra.mxu0 %v322
  %1041 = vmatpush.bf16.msra.mxu0 %v320
  %1042 = vmatpush.bf16.msra.mxu0 %v318
  %1043 = vmatpush.bf16.msra.mxu0 %v316
  %1044 = vmatmul.bf16.gmra.mxu0 %v1034
  %v1045 = vpop.f32.mrf.mxu0
  %v1046 = vadd.f32 0.0, %v1045
  %v1047 = vpop.f32.mrf.mxu0
  %v1048 = vadd.f32 0.0, %v1047
  %1049 = vdwg.mxu0
  %1050 = vmatpush.bf16.msra.mxu0 0
  %1051 = vmatpush.bf16.msra.mxu0 0
  %1052 = vmatpush.bf16.msra.mxu0 0
  %1053 = vmatpush.bf16.msra.mxu0 0
  %1054 = vmatpush.bf16.msra.mxu0 %v323
  %1055 = vmatpush.bf16.msra.mxu0 %v321
  %1056 = vmatpush.bf16.msra.mxu0 %v319
  %1057 = vmatpush.bf16.msra.mxu0 %v317
  %1058 = vmatmul.bf16.gmra.mxu0 %v1034
  %v1059 = vpop.f32.mrf.mxu0
  %v1060 = vadd.f32 0.0, %v1059
  %v1061 = vpop.f32.mrf.mxu0
  %v1062 = vadd.f32 0.0, %v1061
  %1063 = vdwg.mxu0
  %v1064 = vadd.f32 %v1025, %v1046
  %v1065 = vadd.f32 %v1026, %v1060
  %v1066 = vadd.f32 %v1027, %v1048
  %v1067 = vadd.f32 %v1028, %v1062
  %v1068 = vxor.u32 %v1064, 2147483648
  %v1069 = vxor.u32 %v1066, 2147483648
  %v1070 = vmul.f32 %v1068, 1.442695
  %v1071 = vpow.pop %v1070
  %v1072 = vmul.f32 %v1069, 1.442695
  %v1073 = vpow.pop %v1072
  %v1074 = vadd.f32 %v1071, 1.0
  %v1075 = vadd.f32 %v1073, 1.0
  %v1076 = vrcp.pop %v1074
  %v1077 = vmul.f32 %v1074, %v1076
  %v1078 = vsub.f32 1.0, %v1077
  %v1079 = vmul.f32 %v1076, %v1078
  %v1080 = vadd.f32 %v1076, %v1079
  %vm1081 = vweird.f32 %v1074
  %vm1082 = vweird.f32 %v1076
  %vm1083 = vmor %vm1081, %vm1082
  %v1084 = vsel %vm1083, %v1076, %v1080
  %v1085 = vand.u32 2147483647, %v1074
  %vm1086 = vcmp.eq.f32.partialorder %v1085, 8.507059e+37
  %v1087 = vand.u32 %v1074, 2147483648
  %v1088 = vor.u32 1.1754944e-38, %v1087
  %v1089 = vsel %vm1086, %v1088, %v1084
  %v1090 = vmul.f32 1.0, %v1089
  %v1091 = vrcp.pop %v1075
  %v1092 = vmul.f32 %v1075, %v1091
  %v1093 = vsub.f32 1.0, %v1092
  %v1094 = vmul.f32 %v1091, %v1093
  %v1095 = vadd.f32 %v1091, %v1094
  %vm1096 = vweird.f32 %v1075
  %vm1097 = vweird.f32 %v1091
  %vm1098 = vmor %vm1096, %vm1097
  %v1099 = vsel %vm1098, %v1091, %v1095
  %v1100 = vand.u32 2147483647, %v1075
  %vm1101 = vcmp.eq.f32.partialorder %v1100, 8.507059e+37
  %v1102 = vand.u32 %v1075, 2147483648
  %v1103 = vor.u32 1.1754944e-38, %v1102
  %v1104 = vsel %vm1101, %v1103, %v1099
  %v1105 = vmul.f32 1.0, %v1104
  %v1106 = vtanh.pop %v1065
  %v1107 = vtanh.pop %v1067
  %v1108 = vxor.u32 %v1065, 2147483648
  %v1109 = vxor.u32 %v1067, 2147483648
  %v1110 = vmul.f32 %v1108, 1.442695
  %v1111 = vpow.pop %v1110
  %v1112 = vmul.f32 %v1109, 1.442695
  %v1113 = vpow.pop %v1112
  %v1114 = vadd.f32 %v1111, 1.0
  %v1115 = vadd.f32 %v1113, 1.0
  %v1116 = vrcp.pop %v1114
  %v1117 = vmul.f32 %v1114, %v1116
  %v1118 = vsub.f32 1.0, %v1117
  %v1119 = vmul.f32 %v1116, %v1118
  %v1120 = vadd.f32 %v1116, %v1119
  %vm1121 = vweird.f32 %v1114
  %vm1122 = vweird.f32 %v1116
  %vm1123 = vmor %vm1121, %vm1122
  %v1124 = vsel %vm1123, %v1116, %v1120
  %v1125 = vand.u32 2147483647, %v1114
  %vm1126 = vcmp.eq.f32.partialorder %v1125, 8.507059e+37
  %v1127 = vand.u32 %v1114, 2147483648
  %v1128 = vor.u32 1.1754944e-38, %v1127
  %v1129 = vsel %vm1126, %v1128, %v1124
  %v1130 = vmul.f32 1.0, %v1129
  %v1131 = vrcp.pop %v1115
  %v1132 = vmul.f32 %v1115, %v1131
  %v1133 = vsub.f32 1.0, %v1132
  %v1134 = vmul.f32 %v1131, %v1133
  %v1135 = vadd.f32 %v1131, %v1134
  %vm1136 = vweird.f32 %v1115
  %vm1137 = vweird.f32 %v1131
  %vm1138 = vmor %vm1136, %vm1137
  %v1139 = vsel %vm1138, %v1131, %v1135
  %v1140 = vand.u32 2147483647, %v1115
  %vm1141 = vcmp.eq.f32.partialorder %v1140, 8.507059e+37
  %v1142 = vand.u32 %v1115, 2147483648
  %v1143 = vor.u32 1.1754944e-38, %v1142
  %v1144 = vsel %vm1141, %v1143, %v1139
  %v1145 = vmul.f32 1.0, %v1144
  %v1146 = vmul.f32 %v1090, %v1018
  %v1147 = vmul.f32 %v1105, %v1019
  %v1148 = vmul.f32 %v1090, %v1106
  %v1149 = vmul.f32 %v1105, %v1107
  %1152 = vrot.lane.b32.xlu0 %v1148, 64
  %v1153 = vpop.permute.xlu0 %1152
  %1154 = vrot.lane.b32.xlu0 %v1149, 64
  %v1155 = vpop.permute.xlu0 %1154
  %v1158 = vadd.f32 %v1146, %v1153
  %v1159 = vadd.f32 %v1147, %v1155
  %v1160 = vtanh.pop %v1158
  %v1161 = vtanh.pop %v1159
  %v1162 = vmul.f32 %v1130, %v1160
  %v1163 = vmul.f32 %v1145, %v1161
  %s1164 = scalar_lea.vmem [#allocation2], 192
  %v1165 = vld [vmem:[%s1164] sm:$0xff]
  %v1166 = vld [vmem:[%s1164 + $0x8] sm:$0xff]
  %v1167 = vld [vmem:[%s1164 + $0x10] sm:$0xff]
  %v1168 = vld [vmem:[%s1164 + $0x18] sm:$0xff]
  %v1169 = vpack.c.bf16 %v1163, %v1162
  %1171 = vrot.lane.b32.xlu0 %v1169, 64
  %v1172 = vpop.permute.xlu0 %1171
  %v1174 = vsel %vm332, %v1172, 0
  %1176 = vmatpush.bf16.msra.mxu0 0
  %1177 = vmatpush.bf16.msra.mxu0 0
  %1178 = vmatpush.bf16.msra.mxu0 0
  %1179 = vmatpush.bf16.msra.mxu0 0
  %1180 = vmatpush.bf16.msra.mxu0 %v322
  %1181 = vmatpush.bf16.msra.mxu0 %v320
  %1182 = vmatpush.bf16.msra.mxu0 %v318
  %1183 = vmatpush.bf16.msra.mxu0 %v316
  %1184 = vmatmul.bf16.gmra.mxu0 %v1174
  %v1185 = vpop.f32.mrf.mxu0
  %v1186 = vadd.f32 0.0, %v1185
  %v1187 = vpop.f32.mrf.mxu0
  %v1188 = vadd.f32 0.0, %v1187
  %1189 = vdwg.mxu0
  %1190 = vmatpush.bf16.msra.mxu0 0
  %1191 = vmatpush.bf16.msra.mxu0 0
  %1192 = vmatpush.bf16.msra.mxu0 0
  %1193 = vmatpush.bf16.msra.mxu0 0
  %1194 = vmatpush.bf16.msra.mxu0 %v323
  %1195 = vmatpush.bf16.msra.mxu0 %v321
  %1196 = vmatpush.bf16.msra.mxu0 %v319
  %1197 = vmatpush.bf16.msra.mxu0 %v317
  %1198 = vmatmul.bf16.gmra.mxu0 %v1174
  %v1199 = vpop.f32.mrf.mxu0
  %v1200 = vadd.f32 0.0, %v1199
  %v1201 = vpop.f32.mrf.mxu0
  %v1202 = vadd.f32 0.0, %v1201
  %1203 = vdwg.mxu0
  %v1204 = vadd.f32 %v1165, %v1186
  %v1205 = vadd.f32 %v1166, %v1200
  %v1206 = vadd.f32 %v1167, %v1188
  %v1207 = vadd.f32 %v1168, %v1202
  %v1208 = vxor.u32 %v1204, 2147483648
  %v1209 = vxor.u32 %v1206, 2147483648
  %v1210 = vmul.f32 %v1208, 1.442695
  %v1211 = vpow.pop %v1210
  %v1212 = vmul.f32 %v1209, 1.442695
  %v1213 = vpow.pop %v1212
  %v1214 = vadd.f32 %v1211, 1.0
  %v1215 = vadd.f32 %v1213, 1.0
  %v1216 = vrcp.pop %v1214
  %v1217 = vmul.f32 %v1214, %v1216
  %v1218 = vsub.f32 1.0, %v1217
  %v1219 = vmul.f32 %v1216, %v1218
  %v1220 = vadd.f32 %v1216, %v1219
  %vm1221 = vweird.f32 %v1214
  %vm1222 = vweird.f32 %v1216
  %vm1223 = vmor %vm1221, %vm1222
  %v1224 = vsel %vm1223, %v1216, %v1220
  %v1225 = vand.u32 2147483647, %v1214
  %vm1226 = vcmp.eq.f32.partialorder %v1225, 8.507059e+37
  %v1227 = vand.u32 %v1214, 2147483648
  %v1228 = vor.u32 1.1754944e-38, %v1227
  %v1229 = vsel %vm1226, %v1228, %v1224
  %v1230 = vmul.f32 1.0, %v1229
  %v1231 = vrcp.pop %v1215
  %v1232 = vmul.f32 %v1215, %v1231
  %v1233 = vsub.f32 1.0, %v1232
  %v1234 = vmul.f32 %v1231, %v1233
  %v1235 = vadd.f32 %v1231, %v1234
  %vm1236 = vweird.f32 %v1215
  %vm1237 = vweird.f32 %v1231
  %vm1238 = vmor %vm1236, %vm1237
  %v1239 = vsel %vm1238, %v1231, %v1235
  %v1240 = vand.u32 2147483647, %v1215
  %vm1241 = vcmp.eq.f32.partialorder %v1240, 8.507059e+37
  %v1242 = vand.u32 %v1215, 2147483648
  %v1243 = vor.u32 1.1754944e-38, %v1242
  %v1244 = vsel %vm1241, %v1243, %v1239
  %v1245 = vmul.f32 1.0, %v1244
  %v1246 = vtanh.pop %v1205
  %v1247 = vtanh.pop %v1207
  %v1248 = vxor.u32 %v1205, 2147483648
  %v1249 = vxor.u32 %v1207, 2147483648
  %v1250 = vmul.f32 %v1248, 1.442695
  %v1251 = vpow.pop %v1250
  %v1252 = vmul.f32 %v1249, 1.442695
  %v1253 = vpow.pop %v1252
  %v1254 = vadd.f32 %v1251, 1.0
  %v1255 = vadd.f32 %v1253, 1.0
  %v1256 = vrcp.pop %v1254
  %v1257 = vmul.f32 %v1254, %v1256
  %v1258 = vsub.f32 1.0, %v1257
  %v1259 = vmul.f32 %v1256, %v1258
  %v1260 = vadd.f32 %v1256, %v1259
  %vm1261 = vweird.f32 %v1254
  %vm1262 = vweird.f32 %v1256
  %vm1263 = vmor %vm1261, %vm1262
  %v1264 = vsel %vm1263, %v1256, %v1260
  %v1265 = vand.u32 2147483647, %v1254
  %vm1266 = vcmp.eq.f32.partialorder %v1265, 8.507059e+37
  %v1267 = vand.u32 %v1254, 2147483648
  %v1268 = vor.u32 1.1754944e-38, %v1267
  %v1269 = vsel %vm1266, %v1268, %v1264
  %v1270 = vmul.f32 1.0, %v1269
  %v1271 = vrcp.pop %v1255
  %v1272 = vmul.f32 %v1255, %v1271
  %v1273 = vsub.f32 1.0, %v1272
  %v1274 = vmul.f32 %v1271, %v1273
  %v1275 = vadd.f32 %v1271, %v1274
  %vm1276 = vweird.f32 %v1255
  %vm1277 = vweird.f32 %v1271
  %vm1278 = vmor %vm1276, %vm1277
  %v1279 = vsel %vm1278, %v1271, %v1275
  %v1280 = vand.u32 2147483647, %v1255
  %vm1281 = vcmp.eq.f32.partialorder %v1280, 8.507059e+37
  %v1282 = vand.u32 %v1255, 2147483648
  %v1283 = vor.u32 1.1754944e-38, %v1282
  %v1284 = vsel %vm1281, %v1283, %v1279
  %v1285 = vmul.f32 1.0, %v1284
  %v1286 = vmul.f32 %v1230, %v1158
  %v1287 = vmul.f32 %v1245, %v1159
  %v1288 = vmul.f32 %v1230, %v1246
  %v1289 = vmul.f32 %v1245, %v1247
  %1292 = vrot.lane.b32.xlu0 %v1288, 64
  %v1293 = vpop.permute.xlu0 %1292
  %1294 = vrot.lane.b32.xlu0 %v1289, 64
  %v1295 = vpop.permute.xlu0 %1294
  %v1298 = vadd.f32 %v1286, %v1293
  %v1299 = vadd.f32 %v1287, %v1295
  %v1300 = vtanh.pop %v1298
  %v1301 = vtanh.pop %v1299
  %v1302 = vmul.f32 %v1270, %v1300
  %v1303 = vmul.f32 %v1285, %v1301
  %s1304 = scalar_lea.vmem [#allocation2], 224
  %v1305 = vld [vmem:[%s1304] sm:$0xff]
  %v1306 = vld [vmem:[%s1304 + $0x8] sm:$0xff]
  %v1307 = vld [vmem:[%s1304 + $0x10] sm:$0xff]
  %v1308 = vld [vmem:[%s1304 + $0x18] sm:$0xff]
  %v1309 = vpack.c.bf16 %v1303, %v1302
  %1311 = vrot.lane.b32.xlu0 %v1309, 64
  %v1312 = vpop.permute.xlu0 %1311
  %v1314 = vsel %vm332, %v1312, 0
  %1316 = vmatpush.bf16.msra.mxu0 0
  %1317 = vmatpush.bf16.msra.mxu0 0
  %1318 = vmatpush.bf16.msra.mxu0 0
  %1319 = vmatpush.bf16.msra.mxu0 0
  %1320 = vmatpush.bf16.msra.mxu0 %v322
  %1321 = vmatpush.bf16.msra.mxu0 %v320
  %1322 = vmatpush.bf16.msra.mxu0 %v318
  %1323 = vmatpush.bf16.msra.mxu0 %v316
  %1324 = vmatmul.bf16.gmra.mxu0 %v1314
  %v1325 = vpop.f32.mrf.mxu0
  %v1326 = vadd.f32 0.0, %v1325
  %v1327 = vpop.f32.mrf.mxu0
  %v1328 = vadd.f32 0.0, %v1327
  %1329 = vdwg.mxu0
  %1330 = vmatpush.bf16.msra.mxu0 0
  %1331 = vmatpush.bf16.msra.mxu0 0
  %1332 = vmatpush.bf16.msra.mxu0 0
  %1333 = vmatpush.bf16.msra.mxu0 0
  %1334 = vmatpush.bf16.msra.mxu0 %v323
  %1335 = vmatpush.bf16.msra.mxu0 %v321
  %1336 = vmatpush.bf16.msra.mxu0 %v319
  %1337 = vmatpush.bf16.msra.mxu0 %v317
  %1338 = vmatmul.bf16.gmra.mxu0 %v1314
  %v1339 = vpop.f32.mrf.mxu0
  %v1340 = vadd.f32 0.0, %v1339
  %v1341 = vpop.f32.mrf.mxu0
  %v1342 = vadd.f32 0.0, %v1341
  %1343 = vdwg.mxu0
  %v1344 = vadd.f32 %v1305, %v1326
  %v1345 = vadd.f32 %v1306, %v1340
  %v1346 = vadd.f32 %v1307, %v1328
  %v1347 = vadd.f32 %v1308, %v1342
  %v1348 = vxor.u32 %v1344, 2147483648
  %v1349 = vxor.u32 %v1346, 2147483648
  %v1350 = vmul.f32 %v1348, 1.442695
  %v1351 = vpow.pop %v1350
  %v1352 = vmul.f32 %v1349, 1.442695
  %v1353 = vpow.pop %v1352
  %v1354 = vadd.f32 %v1351, 1.0
  %v1355 = vadd.f32 %v1353, 1.0
  %v1356 = vrcp.pop %v1354
  %v1357 = vmul.f32 %v1354, %v1356
  %v1358 = vsub.f32 1.0, %v1357
  %v1359 = vmul.f32 %v1356, %v1358
  %v1360 = vadd.f32 %v1356, %v1359
  %vm1361 = vweird.f32 %v1354
  %vm1362 = vweird.f32 %v1356
  %vm1363 = vmor %vm1361, %vm1362
  %v1364 = vsel %vm1363, %v1356, %v1360
  %v1365 = vand.u32 2147483647, %v1354
  %vm1366 = vcmp.eq.f32.partialorder %v1365, 8.507059e+37
  %v1367 = vand.u32 %v1354, 2147483648
  %v1368 = vor.u32 1.1754944e-38, %v1367
  %v1369 = vsel %vm1366, %v1368, %v1364
  %v1370 = vmul.f32 1.0, %v1369
  %v1371 = vrcp.pop %v1355
  %v1372 = vmul.f32 %v1355, %v1371
  %v1373 = vsub.f32 1.0, %v1372
  %v1374 = vmul.f32 %v1371, %v1373
  %v1375 = vadd.f32 %v1371, %v1374
  %vm1376 = vweird.f32 %v1355
  %vm1377 = vweird.f32 %v1371
  %vm1378 = vmor %vm1376, %vm1377
  %v1379 = vsel %vm1378, %v1371, %v1375
  %v1380 = vand.u32 2147483647, %v1355
  %vm1381 = vcmp.eq.f32.partialorder %v1380, 8.507059e+37
  %v1382 = vand.u32 %v1355, 2147483648
  %v1383 = vor.u32 1.1754944e-38, %v1382
  %v1384 = vsel %vm1381, %v1383, %v1379
  %v1385 = vmul.f32 1.0, %v1384
  %v1386 = vtanh.pop %v1345
  %v1387 = vtanh.pop %v1347
  %v1388 = vxor.u32 %v1345, 2147483648
  %v1389 = vxor.u32 %v1347, 2147483648
  %v1390 = vmul.f32 %v1388, 1.442695
  %v1391 = vpow.pop %v1390
  %v1392 = vmul.f32 %v1389, 1.442695
  %v1393 = vpow.pop %v1392
  %v1394 = vadd.f32 %v1391, 1.0
  %v1395 = vadd.f32 %v1393, 1.0
  %v1396 = vrcp.pop %v1394
  %v1397 = vmul.f32 %v1394, %v1396
  %v1398 = vsub.f32 1.0, %v1397
  %v1399 = vmul.f32 %v1396, %v1398
  %v1400 = vadd.f32 %v1396, %v1399
  %vm1401 = vweird.f32 %v1394
  %vm1402 = vweird.f32 %v1396
  %vm1403 = vmor %vm1401, %vm1402
  %v1404 = vsel %vm1403, %v1396, %v1400
  %v1405 = vand.u32 2147483647, %v1394
  %vm1406 = vcmp.eq.f32.partialorder %v1405, 8.507059e+37
  %v1407 = vand.u32 %v1394, 2147483648
  %v1408 = vor.u32 1.1754944e-38, %v1407
  %v1409 = vsel %vm1406, %v1408, %v1404
  %v1410 = vmul.f32 1.0, %v1409
  %v1411 = vrcp.pop %v1395
  %v1412 = vmul.f32 %v1395, %v1411
  %v1413 = vsub.f32 1.0, %v1412
  %v1414 = vmul.f32 %v1411, %v1413
  %v1415 = vadd.f32 %v1411, %v1414
  %vm1416 = vweird.f32 %v1395
  %vm1417 = vweird.f32 %v1411
  %vm1418 = vmor %vm1416, %vm1417
  %v1419 = vsel %vm1418, %v1411, %v1415
  %v1420 = vand.u32 2147483647, %v1395
  %vm1421 = vcmp.eq.f32.partialorder %v1420, 8.507059e+37
  %v1422 = vand.u32 %v1395, 2147483648
  %v1423 = vor.u32 1.1754944e-38, %v1422
  %v1424 = vsel %vm1421, %v1423, %v1419
  %v1425 = vmul.f32 1.0, %v1424
  %v1426 = vmul.f32 %v1370, %v1298
  %v1427 = vmul.f32 %v1385, %v1299
  %v1428 = vmul.f32 %v1370, %v1386
  %v1429 = vmul.f32 %v1385, %v1387
  %1432 = vrot.lane.b32.xlu0 %v1428, 64
  %v1433 = vpop.permute.xlu0 %1432
  %1434 = vrot.lane.b32.xlu0 %v1429, 64
  %v1435 = vpop.permute.xlu0 %1434
  %v1438 = vadd.f32 %v1426, %v1433
  %v1439 = vadd.f32 %v1427, %v1435
  %v1440 = vtanh.pop %v1438
  %v1441 = vtanh.pop %v1439
  %v1442 = vmul.f32 %v1410, %v1440
  %v1443 = vmul.f32 %v1425, %v1441
  %1446 = vrot.lane.b32.xlu0 %v1442, 64
  %v1447 = vpop.permute.xlu0 %1446
  %1448 = vrot.lane.b32.xlu0 %v1443, 64
  %v1449 = vpop.permute.xlu0 %1448
  %1452 = vst.msk [vmem:[%s4] sm:$0xff] %vm332, %v1447
  %1453 = vst.msk [vmem:[%s4 + $0x8] sm:$0xff] %vm332, %v1449
  // Predicated region
  $region18: #{two_layer_lstm_forward.2} parent=0 // pred_check
    _
  $region19: #{two_layer_lstm_forward.2} parent=0 // pred_check_branch
    %1455 = sbr.rel (0) target = $region21
  $region20: #{two_layer_lstm_forward.2} parent=0 // pred_region
    _
  $region21: #{two_layer_lstm_forward.2} parent=0 // pred_fallthru
    _
  // Predicated region
  $region22: #{two_layer_lstm_forward.2} parent=0 // pred_check
    _
  $region23: #{two_layer_lstm_forward.2} parent=0 // pred_check_branch
    %1457 = sbr.rel (0) target = $region25
  $region24: #{two_layer_lstm_forward.2} parent=0 // pred_region
    _
  $region25: #{two_layer_lstm_forward.2} parent=0 // pred_fallthru
    _

</llo_original>
